<compile_context>
chip_gen: v6e
topology: v6e:2x2x1
jax: 0.10.0
libtpu: 0.0.40
codegen_flags: <defaults>
</compile_context>

<pallas_src>
import jax
import jax.numpy as jnp
from jax.experimental import pallas as pl
from jax.experimental.pallas import tpu as pltpu


def _pick_tile_rows(n_rows: int) -> int:
    """Row-tile size.  Always a multiple of 128 so each tile's output is a
    lane-dense (tile//128, 128) slab.

    Preference order:
      1. divides n_rows with >= 4 grid steps (2+ pipelined steps per v7x TC),
      2. divides n_rows with >= 2 steps,
      3. divides n_rows at all,
      4. ragged last tile (cdiv grid) for row counts not a multiple of 128.
    """
    for min_steps in (4, 2, 1):
        for t in (512, 384, 256):
            if n_rows % t == 0 and n_rows // t >= min_steps:
                return t
    if n_rows >= 128 and n_rows % 128 == 0:
        return 128
    return 256 if n_rows > 256 else 128


def _token_confidence_kernel(x_ref, w_ref, b_ref, o_ref):
    """sigmoid(x @ w.T + b) for one row tile, stored lane-dense.

    x_ref: (TR, D)            VMEM  descriptor rows (any float dtype)
    w_ref: (1, D)             VMEM  Linear weight row (lane-dense, resident)
    b_ref: (1,)               SMEM  Linear bias scalar
    o_ref: (1, TR//128, 128)  VMEM  confidences (lane-dense slab)
    """
    g = o_ref.shape[1]
    d = x_ref.shape[1]
    x = x_ref[...].astype(jnp.float32)            # in-vreg cast (bf16 inputs OK)
    w = w_ref[...].astype(jnp.float32)            # (1, D)
    prod = (x * w).reshape(g, 128, d)             # VPU mul; free major-dim split
    logits = jnp.sum(prod, axis=-1) + b_ref[0]    # XLU lane reduce -> (g, 128)
    # exp and reciprocal both run on the otherwise idle EUP slot.
    o_ref[0] = pl.reciprocal(1.0 + jnp.exp(-logits), approx=True)


def _row_confidences(x2d, w_row, b_vec):
    """x2d: (R, D) descriptors -> (R,) f32 confidences; one streaming pass."""
    R, D = x2d.shape
    tile_rows = _pick_tile_rows(R)
    assert tile_rows % 128 == 0
    steps = pl.cdiv(R, tile_rows)
    g = tile_rows // 128

    out = pl.pallas_call(
        _token_confidence_kernel,
        out_shape=jax.ShapeDtypeStruct((steps, g, 128), jnp.float32),
        grid_spec=pltpu.PrefetchScalarGridSpec(
            num_scalar_prefetch=0,
            grid=(steps,),
            in_specs=[
                pl.BlockSpec((tile_rows, D), lambda i: (i, 0)),
                pl.BlockSpec((1, D), lambda i: (0, 0)),        # fetched once, stays resident
                pl.BlockSpec(memory_space=pltpu.MemorySpace.SMEM),
            ],
            out_specs=pl.BlockSpec((1, g, 128), lambda i: (i, 0, 0)),
        ),
        compiler_params=pltpu.CompilerParams(
            dimension_semantics=("parallel",)),
    )(x2d, w_row, b_vec)
    # Flatten and drop any garbage rows written for a ragged last tile.
    return out.reshape(-1)[:R]


def token_confidence(desc0, desc1, weight, bias):
    """desc0: (B, N0, D), desc1: (B, N1, D), weight: (1, D), bias: (1,).

    Returns (conf0 (B, N0), conf1 (B, N1)) float32, matching
    TokenConfidence.forward.  Descriptors are NOT upcast in the wrapper:
    bf16/fp16 inputs stream at half the HBM bytes and are cast to f32
    in-register inside the kernel.
    """
    B, N0, D = desc0.shape
    B1, N1, D1 = desc1.shape
    assert B1 == B and D1 == D

    w_row = jnp.asarray(weight, jnp.float32).reshape(1, D)
    b_vec = jnp.asarray(bias, jnp.float32).reshape(1)

    # reshape(B*N, D) only merges contiguous major dims: a free bitcast, no copy.
    conf0 = _row_confidences(desc0.reshape(B * N0, D), w_row, b_vec).reshape(B, N0)
    conf1 = _row_confidences(desc1.reshape(B * N1, D), w_row, b_vec).reshape(B, N1)
    return conf0, conf1


def _reference(desc, weight, bias):
    """Plain-JAX reference matching the PyTorch forward exactly."""
    logits = jnp.einsum("bnd,od->bno", desc.astype(jnp.float32), weight,
                        precision=jax.lax.Precision.HIGHEST) + bias
    return jax.nn.sigmoid(logits)[..., 0]


# TODO(synk): TokenConfidence.loss (BCEWithLogitsLoss over assignment-argmax
# targets) is a training-only path and is intentionally not implemented.

if __name__ == "__main__":
    key = jax.random.PRNGKey(0)
    k0, k1, kw, kb = jax.random.split(key, 4)

    B, N0, N1, D = 2, 512, 384, 256          # LightGlue descriptor_dim = 256
    desc0 = jax.random.normal(k0, (B, N0, D), dtype=jnp.float32)
    desc1 = jax.random.normal(k1, (B, N1, D), dtype=jnp.float32)
    # nn.Linear(dim, 1) default init: U(-1/sqrt(dim), 1/sqrt(dim))
    bound = 1.0 / (D ** 0.5)
    weight = jax.random.uniform(kw, (1, D), minval=-bound, maxval=bound,
                                dtype=jnp.float32)
    bias = jax.random.uniform(kb, (1,), minval=-bound, maxval=bound,
                              dtype=jnp.float32)

    fwd = jax.jit(token_confidence)
    conf0, conf1 = jax.block_until_ready(fwd(desc0, desc1, weight, bias))

    ref0 = _reference(desc0, weight, bias)
    ref1 = _reference(desc1, weight, bias)
    assert conf0.shape == (B, N0), conf0.shape
    assert conf1.shape == (B, N1), conf1.shape
    # Tolerance covers the approx-EUP reciprocal (~2^-12 rel) and f32
    # accumulation-order differences vs the HIGHEST-precision reference.
    assert jnp.allclose(conf0, ref0, atol=2e-3, rtol=2e-3), "desc0 mismatch"
    assert jnp.allclose(conf1, ref1, atol=2e-3, rtol=2e-3), "desc1 mismatch"

    print("KERNEL_OK")
</pallas_src>

<mosaic_0001>
module attributes {stable_mosaic.version = 11 : i64} {
  func.func @_token_confidence_kernel(%arg0: i32, %arg1: memref<256x256xf32, #tpu.memory_space<vmem>>, %arg2: memref<1x256xf32, #tpu.memory_space<vmem>>, %arg3: memref<1xf32, #tpu.memory_space<smem>>, %arg4: memref<1x2x128xf32, #tpu.memory_space<vmem>>) attributes {dimension_semantics = [#tpu.dimension_semantics<parallel>], iteration_bounds = array<i64: 4>, scalar_prefetch = 0 : i64, scratch_operands = 0 : i64, tpu.core_type = #tpu.core_type<tc>, window_params = [{transform_indices = @transform_0, window_bounds = array<i64: 256, 256>}, {pipeline_mode = #tpu.pipeline_mode<synchronous>, transform_indices = @transform_1, window_bounds = array<i64: 1, 256>}, {transform_indices = @transform_2, window_bounds = array<i64: 1>}, {transform_indices = @transform_3, window_bounds = array<i64: 1, 2, 128>}]} {
    %c0 = arith.constant 0 : index
    %c0_0 = arith.constant 0 : index
    %0 = vector.load %arg1[%c0, %c0_0] : memref<256x256xf32, #tpu.memory_space<vmem>>, vector<256x256xf32>
    %c0_1 = arith.constant 0 : index
    %c0_2 = arith.constant 0 : index
    %1 = vector.load %arg2[%c0_1, %c0_2] : memref<1x256xf32, #tpu.memory_space<vmem>>, vector<1x256xf32>
    %2 = vector.broadcast %1 : vector<1x256xf32> to vector<256x256xf32>
    %3 = arith.mulf %0, %2 : vector<256x256xf32>
    %4 = vector.shape_cast %3 : vector<256x256xf32> to vector<2x128x256xf32>
    %cst = arith.constant dense<0.000000e+00> : vector<2x128xf32>
    %5 = vector.multi_reduction <add>, %4, %cst [2] : vector<2x128x256xf32> to vector<2x128xf32>
    %c0_3 = arith.constant 0 : index
    %6 = memref.load %arg3[%c0_3] : memref<1xf32, #tpu.memory_space<smem>>
    %7 = vector.broadcast %6 : f32 to vector<2x128xf32>
    %8 = arith.addf %5, %7 : vector<2x128xf32>
    %cst_4 = arith.constant 0.000000e+00 : f32
    %9 = vector.broadcast %cst_4 : f32 to vector<2x128xf32>
    %10 = arith.subf %9, %8 : vector<2x128xf32>
    %11 = math.exp %10 : vector<2x128xf32>
    %cst_5 = arith.constant 1.000000e+00 : f32
    %12 = vector.broadcast %cst_5 : f32 to vector<2x128xf32>
    %13 = arith.addf %12, %11 : vector<2x128xf32>
    %14 = tpu.reciprocal %13 {approx = true} : vector<2x128xf32> -> vector<2x128xf32>
    %c0_6 = arith.constant 0 : index
    %c0_7 = arith.constant 0 : index
    %c0_8 = arith.constant 0 : index
    %15 = vector.load %arg4[%c0_6, %c0_7, %c0_8] : memref<1x2x128xf32, #tpu.memory_space<vmem>>, vector<1x2x128xf32>
    %16 = vector.shape_cast %15 : vector<1x2x128xf32> to vector<2x128xf32>
    %17 = vector.shape_cast %14 : vector<2x128xf32> to vector<1x2x128xf32>
    tpu.vector_store %arg4[%c0_6, %c0_7, %c0_8], %17 {strides = array<i32>} : memref<1x2x128xf32, #tpu.memory_space<vmem>>, vector<1x2x128xf32>,
    return
  }
  func.func @transform_0(%arg0: i32) -> (i32, i32) {
    %c0_i32 = arith.constant 0 : i32
    %c0_i32_0 = arith.constant 0 : i32
    return %arg0, %c0_i32 : i32, i32
  }
  func.func @transform_1(%arg0: i32) -> (i32, i32) {
    %c0_i32 = arith.constant 0 : i32
    %c0_i32_0 = arith.constant 0 : i32
    %c0_i32_1 = arith.constant 0 : i32
    return %c0_i32, %c0_i32_0 : i32, i32
  }
  func.func @transform_2(%arg0: i32) -> i32 {
    %c0_i32 = arith.constant 0 : i32
    %c0_i32_0 = arith.constant 0 : i32
    return %c0_i32 : i32
  }
  func.func @transform_3(%arg0: i32) -> (i32, i32, i32) {
    %c0_i32 = arith.constant 0 : i32
    %c0_i32_0 = arith.constant 0 : i32
    %c0_i32_1 = arith.constant 0 : i32
    return %arg0, %c0_i32, %c0_i32_0 : i32, i32, i32
  }
}

module attributes {stable_mosaic.version = 11 : i64} {
  func.func @_token_confidence_kernel(%arg0: i32, %arg1: memref<384x256xf32, #tpu.memory_space<vmem>>, %arg2: memref<1x256xf32, #tpu.memory_space<vmem>>, %arg3: memref<1xf32, #tpu.memory_space<smem>>, %arg4: memref<1x3x128xf32, #tpu.memory_space<vmem>>) attributes {dimension_semantics = [#tpu.dimension_semantics<parallel>], iteration_bounds = array<i64: 2>, scalar_prefetch = 0 : i64, scratch_operands = 0 : i64, tpu.core_type = #tpu.core_type<tc>, window_params = [{transform_indices = @transform_0, window_bounds = array<i64: 384, 256>}, {pipeline_mode = #tpu.pipeline_mode<synchronous>, transform_indices = @transform_1, window_bounds = array<i64: 1, 256>}, {transform_indices = @transform_2, window_bounds = array<i64: 1>}, {transform_indices = @transform_3, window_bounds = array<i64: 1, 3, 128>}]} {
    %c0 = arith.constant 0 : index
    %c0_0 = arith.constant 0 : index
    %0 = vector.load %arg1[%c0, %c0_0] : memref<384x256xf32, #tpu.memory_space<vmem>>, vector<384x256xf32>
    %c0_1 = arith.constant 0 : index
    %c0_2 = arith.constant 0 : index
    %1 = vector.load %arg2[%c0_1, %c0_2] : memref<1x256xf32, #tpu.memory_space<vmem>>, vector<1x256xf32>
    %2 = vector.broadcast %1 : vector<1x256xf32> to vector<384x256xf32>
    %3 = arith.mulf %0, %2 : vector<384x256xf32>
    %4 = vector.shape_cast %3 : vector<384x256xf32> to vector<3x128x256xf32>
    %cst = arith.constant dense<0.000000e+00> : vector<3x128xf32>
    %5 = vector.multi_reduction <add>, %4, %cst [2] : vector<3x128x256xf32> to vector<3x128xf32>
    %c0_3 = arith.constant 0 : index
    %6 = memref.load %arg3[%c0_3] : memref<1xf32, #tpu.memory_space<smem>>
    %7 = vector.broadcast %6 : f32 to vector<3x128xf32>
    %8 = arith.addf %5, %7 : vector<3x128xf32>
    %cst_4 = arith.constant 0.000000e+00 : f32
    %9 = vector.broadcast %cst_4 : f32 to vector<3x128xf32>
    %10 = arith.subf %9, %8 : vector<3x128xf32>
    %11 = math.exp %10 : vector<3x128xf32>
    %cst_5 = arith.constant 1.000000e+00 : f32
    %12 = vector.broadcast %cst_5 : f32 to vector<3x128xf32>
    %13 = arith.addf %12, %11 : vector<3x128xf32>
    %14 = tpu.reciprocal %13 {approx = true} : vector<3x128xf32> -> vector<3x128xf32>
    %c0_6 = arith.constant 0 : index
    %c0_7 = arith.constant 0 : index
    %c0_8 = arith.constant 0 : index
    %15 = vector.load %arg4[%c0_6, %c0_7, %c0_8] : memref<1x3x128xf32, #tpu.memory_space<vmem>>, vector<1x3x128xf32>
    %16 = vector.shape_cast %15 : vector<1x3x128xf32> to vector<3x128xf32>
    %17 = vector.shape_cast %14 : vector<3x128xf32> to vector<1x3x128xf32>
    tpu.vector_store %arg4[%c0_6, %c0_7, %c0_8], %17 {strides = array<i32>} : memref<1x3x128xf32, #tpu.memory_space<vmem>>, vector<1x3x128xf32>,
    return
  }
  func.func @transform_0(%arg0: i32) -> (i32, i32) {
    %c0_i32 = arith.constant 0 : i32
    %c0_i32_0 = arith.constant 0 : i32
    return %arg0, %c0_i32 : i32, i32
  }
  func.func @transform_1(%arg0: i32) -> (i32, i32) {
    %c0_i32 = arith.constant 0 : i32
    %c0_i32_0 = arith.constant 0 : i32
    %c0_i32_1 = arith.constant 0 : i32
    return %c0_i32, %c0_i32_0 : i32, i32
  }
  func.func @transform_2(%arg0: i32) -> i32 {
    %c0_i32 = arith.constant 0 : i32
    %c0_i32_0 = arith.constant 0 : i32
    return %c0_i32 : i32
  }
  func.func @transform_3(%arg0: i32) -> (i32, i32, i32) {
    %c0_i32 = arith.constant 0 : i32
    %c0_i32_0 = arith.constant 0 : i32
    %c0_i32_1 = arith.constant 0 : i32
    return %arg0, %c0_i32, %c0_i32_0 : i32, i32, i32
  }
}

</mosaic_0001>

<llo_original>
// kernel: token_confidence.2
$region0: #{token_confidence.2}
  #allocation0 [shape = 'u32[]', space=smem, size = 0x4, offset = 0x4, fixed_abs, tag = 'smem constant byte address 0x4 - core index']
  #allocation1 [shape = 'u32[144,128]{1,0:T(1,128)}', space=vmem, size = 0x12000, scoped, tag = 'internal scratch']
  #allocation2 [shape = 'f32[1]{0:T(128)S(6)}', space=smem, size = 0x200, scoped, tag = 'scoped memory for token_confidence.2']
  %s0 = inlined_call_operand.hbm [shape: f32[1024,256], index: 0, kind: input, shape index: {}]
  %s1 = inlined_call_operand.vmem [shape: f32[1,256], index: 1, kind: input, shape index: {}]
  %s2 = inlined_call_operand.<no memory space> [shape: f32[1], index: 2, kind: input, shape index: {}]
  %s3 = inlined_call_operand.vmem [shape: f32[4,2,128], index: 3, kind: output, shape index: {}]
  %s4 = sld [smem:[#allocation0]]
  $region49: #{token_confidence.2} parent=0
    _
  %s6 = ssub.s32 1, %s4
  %s7 = scalar_select 0, %s6, %s4
  %8 = sst [smem:[#allocation2]] %s2
  $region1: #{token_confidence.2} parent=0
    #allocation3 [shape = 'u8[524288]{0}', space=vmem, size = 0x80000, scoped, tag = 'input window, operand 0']
    #allocation4 [shape = 's32[2]{0}', space=sflag, size = 0x8, scoped, tag = 'scoped memory for token_confidence.2']
    %9 = vsyncpa [#allocation4], 0
    %s10 = scalar_lea.sflag [#allocation4], 1
    %11 = vsyncpa %s10, 0
    loop: start=0, step=1, limit=6
    $region2: #{token_confidence.2} parent=1 // loop_pre_header
      _
    $region3: #{token_confidence.2} parent=1 // loop_header
      %s13 = sphi 0, %s17
      %p14 = scmp.ge.s32.totalorder %s13, 6
      %s23 = sphi 0, %s25
      %s26 = sphi 0, %s23
      %s27 = sphi 0, %s26
      %s43 = sphi 0, %s27
      %s47 = sphi 0, %s47
      %s49 = sphi 0, %s47
      %s50 = sphi 0, %s49
      %s64 = sphi 0, %s50
      %s68 = sphi 0, %s68
      %s70 = sphi 0, %s68
      %s71 = sphi 0, %s70
      %s85 = sphi 0, %s71
      %s91 = sphi 0, %s93
      %s94 = sphi 0, %s91
      %s95 = sphi 0, %s94
      %s111 = sphi 0, %s95
    $region4: #{token_confidence.2} parent=1 // loop_header_branch
      %16 = sbr.rel (%p14) target = $region8
    $region5: #{token_confidence.2} parent=1 // loop_body
      %s18 = ssub.s32 %s13, 1
      %s19 = ssub.s32 %s13, 2
      %s20 = sadd.s32 %s13, 1
      %s21 = ssub.s32 %s13, %s20
      %p22 = scmp.eq.s32.totalorder %s21, 0
      %s24 = sadd.s32 %s23, 1
      %s25 = scalar_select %p22, %s23, %s24
      %p28 = pneg %p22
      %p29 = scmp.eq.s32.totalorder %s13, 3
      %p30 = por %p28, %p29
      %p31 = scmp.ne.s32.totalorder %s23, %s26
      %p32 = scmp.eq.s32.totalorder %s13, 0
      %p33 = por %p31, %p32
      %p34 = scmp.ne.s32.totalorder %s23, %s26
      %p35 = scmp.eq.s32.totalorder %s18, 3
      %p36 = por %p34, %p35
      %p37 = scmp.ne.s32.totalorder %s26, %s27
      %p38 = scmp.eq.s32.totalorder %s18, 0
      %p39 = por %p37, %p38
      %p40 = scmp.ne.s32.totalorder %s26, %s27
      %p41 = scmp.eq.s32.totalorder %s19, 3
      %p42 = por %p40, %p41
      %p44 = scmp.ne.s32.totalorder %s27, %s43
      %p45 = scmp.eq.s32.totalorder %s19, 0
      %p46 = por %p44, %p45
      %s48 = sadd.s32 %s47, 1
      %p51 = scmp.eq.s32.totalorder %s13, 3
      %p52 = scmp.ne.s32.totalorder %s47, %s49
      %p53 = scmp.eq.s32.totalorder %s13, 0
      %p54 = por %p52, %p53
      %p55 = scmp.ne.s32.totalorder %s47, %s49
      %p56 = scmp.eq.s32.totalorder %s18, 3
      %p57 = por %p55, %p56
      %p58 = scmp.ne.s32.totalorder %s49, %s50
      %p59 = scmp.eq.s32.totalorder %s18, 0
      %p60 = por %p58, %p59
      %p61 = scmp.ne.s32.totalorder %s49, %s50
      %p62 = scmp.eq.s32.totalorder %s19, 3
      %p63 = por %p61, %p62
      %p65 = scmp.ne.s32.totalorder %s50, %s64
      %p66 = scmp.eq.s32.totalorder %s19, 0
      %p67 = por %p65, %p66
      %s69 = sadd.s32 %s68, 1
      %p72 = scmp.eq.s32.totalorder %s13, 3
      %p73 = scmp.ne.s32.totalorder %s68, %s70
      %p74 = scmp.eq.s32.totalorder %s13, 0
      %p75 = por %p73, %p74
      %p76 = scmp.ne.s32.totalorder %s68, %s70
      %p77 = scmp.eq.s32.totalorder %s18, 3
      %p78 = por %p76, %p77
      %p79 = scmp.ne.s32.totalorder %s70, %s71
      %p80 = scmp.eq.s32.totalorder %s18, 0
      %p81 = por %p79, %p80
      %p82 = scmp.ne.s32.totalorder %s70, %s71
      %p83 = scmp.eq.s32.totalorder %s19, 3
      %p84 = por %p82, %p83
      %p86 = scmp.ne.s32.totalorder %s71, %s85
      %p87 = scmp.eq.s32.totalorder %s19, 0
      %p88 = por %p86, %p87
      %s89 = ssub.s32 %s13, %s20
      %p90 = scmp.eq.s32.totalorder %s89, 0
      %s92 = sadd.s32 %s91, 1
      %s93 = scalar_select %p90, %s91, %s92
      %p96 = pneg %p90
      %p97 = scmp.eq.s32.totalorder %s13, 3
      %p98 = por %p96, %p97
      %p99 = scmp.ne.s32.totalorder %s91, %s94
      %p100 = scmp.eq.s32.totalorder %s13, 0
      %p101 = por %p99, %p100
      %p102 = scmp.ne.s32.totalorder %s91, %s94
      %p103 = scmp.eq.s32.totalorder %s18, 3
      %p104 = por %p102, %p103
      %p105 = scmp.ne.s32.totalorder %s94, %s95
      %p106 = scmp.eq.s32.totalorder %s18, 0
      %p107 = por %p105, %p106
      %p108 = scmp.ne.s32.totalorder %s94, %s95
      %p109 = scmp.eq.s32.totalorder %s19, 3
      %p110 = por %p108, %p109
      %p112 = scmp.ne.s32.totalorder %s95, %s111
      %p113 = scmp.eq.s32.totalorder %s19, 0
      %p114 = por %p112, %p113
      %p115 = scmp.le.s32.totalorder 1, %s13
      %p116 = scmp.lt.s32.totalorder %s13, 5
      %p117 = pnand %p115, %p116
      %p118 = pneg %p117
      // Predicated region
      $region9: #{token_confidence.2} parent=5 // pred_check
        _
      $region10: #{token_confidence.2} parent=5 // pred_check_branch
        %120 = sbr.rel (%p117) target = $region12
      $region11: #{token_confidence.2} parent=5 // pred_region
        %s121 = ssub.s32 %s13, 1
        // Predicated region
        $region13: #{token_confidence.2} parent=11 // pred_check
          %p122 = pneg %p60
        $region14: #{token_confidence.2} parent=11 // pred_check_branch
          %124 = sbr.rel (%p122) target = $region16
        $region15: #{token_confidence.2} parent=11 // pred_region
          _
        $region16: #{token_confidence.2} parent=11 // pred_fallthru
          _
        // Predicated region
        $region17: #{token_confidence.2} parent=11 // pred_check
          %p125 = pneg %p81
        $region18: #{token_confidence.2} parent=11 // pred_check_branch
          %127 = sbr.rel (%p125) target = $region20
        $region19: #{token_confidence.2} parent=11 // pred_region
          _
        $region20: #{token_confidence.2} parent=11 // pred_fallthru
          _
      $region12: #{token_confidence.2} parent=5 // pred_fallthru
        _
      %p128 = scmp.lt.s32.totalorder %s13, 4
      // Predicated region
      $region21: #{token_confidence.2} parent=5 // pred_check
        %p129 = pneg %p128
      $region22: #{token_confidence.2} parent=5 // pred_check_branch
        %131 = sbr.rel (%p129) target = $region24
      $region23: #{token_confidence.2} parent=5 // pred_region
        // Predicated region
        $region25: #{token_confidence.2} parent=23 // pred_check
          %p132 = pneg %p33
        $region26: #{token_confidence.2} parent=23 // pred_check_branch
          %134 = sbr.rel (%p132) target = $region28
        $region27: #{token_confidence.2} parent=23 // pred_region
          %s135 = sand.u32 %s23, 1
          %s136 = scalar_lea.sflag [#allocation4], %s135
          %s137 = sand.u32 %s23, 1
          %s138 = smul.addr %s137, 512
          %s139 = scalar_lea.vmem [#allocation3], %s138
          %s140 = smul.u32 32, %s13
          %s142 = ssub.s32 8192, 8192
          %143 = vsyncadd %s136, %s142
          %s144 = smul.addr %s140, 2
          %s145 = smul.addr %s144, 128
          %s146 = scalar_lea.hbm %s0, %s145
          %s147 = sshll.u32 %s139, 4
          %s148 = int_to_ptr.vmem [resolvable:$true] %s147
          %153 = dma.hbm_to_vmem [thread:$0]  %s146, 8192, %s148, %s136, 256, 256, 16
        $region28: #{token_confidence.2} parent=23 // pred_fallthru
          _
      $region24: #{token_confidence.2} parent=5 // pred_fallthru
        _
      %p154 = scmp.le.s32.totalorder 1, %s13
      %p155 = scmp.lt.s32.totalorder %s13, 5
      %p156 = pnand %p154, %p155
      %p157 = pneg %p156
      // Predicated region
      $region29: #{token_confidence.2} parent=5 // pred_check
        _
      $region30: #{token_confidence.2} parent=5 // pred_check_branch
        %159 = sbr.rel (%p156) target = $region32
      $region31: #{token_confidence.2} parent=5 // pred_region
        %s160 = ssub.s32 %s13, 1
        %s161 = sand.u32 %s26, 1
        %s162 = scalar_lea.sflag [#allocation4], %s161
        %s163 = sand.u32 %s26, 1
        %s164 = smul.addr %s163, 512
        %s165 = scalar_lea.vmem [#allocation3], %s164
        // Predicated region
        $region33: #{token_confidence.2} parent=31 // pred_check
          %p166 = pneg %p39
        $region34: #{token_confidence.2} parent=31 // pred_check_branch
          %168 = sbr.rel (%p166) target = $region36
        $region35: #{token_confidence.2} parent=31 // pred_region
          %169 = dma.done %s162, 8192
        $region36: #{token_confidence.2} parent=31 // pred_fallthru
          _
        %s170 = sand.u32 %s26, 1
        %s171 = scalar_lea.sflag [#allocation4], %s170
        %s172 = sand.u32 %s26, 1
        %s173 = smul.addr %s172, 512
        %s174 = scalar_lea.vmem [#allocation3], %s173
        %p175 = pneg %p39
        %p176 = pneg %p36
        %p177 = pneg %p60
        %p178 = pneg %p57
        %p179 = pneg %p81
        %p180 = pneg %p78
        %p181 = pneg %p107
        %p182 = pneg %p104
        %p183 = scmp.lt.s32.totalorder %s18, 3
        %s184 = scalar_select %p183, %s18, 3
        %s185 = smul.addr %s184, 2
        %s186 = scalar_lea.vmem %s3, %s185
        %s187 = smul.u32 32, %s18
        %p188 = scmp.lt.s32.totalorder %s18, 3
        %s189 = scalar_select %p188, %s18, 3
        %s190 = smul.addr %s189, 2
        %s191 = scalar_lea.vmem %s3, %s190
        %v192 = vld [vmem:[%s165] sm:$0xff]
        %v193 = vld [vmem:[%s165 + $0x8] sm:$0xff]
        %v194 = vld [vmem:[%s165 + $0x10] sm:$0xff]
        %v195 = vld [vmem:[%s165 + $0x18] sm:$0xff]
        %v196 = vld [vmem:[%s165 + $0x20] sm:$0xff]
        %v197 = vld [vmem:[%s165 + $0x28] sm:$0xff]
        %v198 = vld [vmem:[%s165 + $0x30] sm:$0xff]
        %v199 = vld [vmem:[%s165 + $0x38] sm:$0xff]
        %v200 = vld [vmem:[%s165 + $0x40] sm:$0xff]
        %v201 = vld [vmem:[%s165 + $0x48] sm:$0xff]
        %v202 = vld [vmem:[%s165 + $0x50] sm:$0xff]
        %v203 = vld [vmem:[%s165 + $0x58] sm:$0xff]
        %v204 = vld [vmem:[%s165 + $0x60] sm:$0xff]
        %v205 = vld [vmem:[%s165 + $0x68] sm:$0xff]
        %v206 = vld [vmem:[%s165 + $0x70] sm:$0xff]
        %v207 = vld [vmem:[%s165 + $0x78] sm:$0xff]
        %v208 = vld [vmem:[%s165 + $0x80] sm:$0xff]
        %v209 = vld [vmem:[%s165 + $0x88] sm:$0xff]
        %v210 = vld [vmem:[%s165 + $0x90] sm:$0xff]
        %v211 = vld [vmem:[%s165 + $0x98] sm:$0xff]
        %v212 = vld [vmem:[%s165 + $0xa0] sm:$0xff]
        %v213 = vld [vmem:[%s165 + $0xa8] sm:$0xff]
        %v214 = vld [vmem:[%s165 + $0xb0] sm:$0xff]
        %v215 = vld [vmem:[%s165 + $0xb8] sm:$0xff]
        %v216 = vld [vmem:[%s165 + $0xc0] sm:$0xff]
        %v217 = vld [vmem:[%s165 + $0xc8] sm:$0xff]
        %v218 = vld [vmem:[%s165 + $0xd0] sm:$0xff]
        %v219 = vld [vmem:[%s165 + $0xd8] sm:$0xff]
        %v220 = vld [vmem:[%s165 + $0xe0] sm:$0xff]
        %v221 = vld [vmem:[%s165 + $0xe8] sm:$0xff]
        %v222 = vld [vmem:[%s165 + $0xf0] sm:$0xff]
        %v223 = vld [vmem:[%s165 + $0xf8] sm:$0xff]
        %v224 = vld [vmem:[%s165 + $0x100] sm:$0xff]
        %v225 = vld [vmem:[%s165 + $0x108] sm:$0xff]
        %v226 = vld [vmem:[%s165 + $0x110] sm:$0xff]
        %v227 = vld [vmem:[%s165 + $0x118] sm:$0xff]
        %v228 = vld [vmem:[%s165 + $0x120] sm:$0xff]
        %v229 = vld [vmem:[%s165 + $0x128] sm:$0xff]
        %v230 = vld [vmem:[%s165 + $0x130] sm:$0xff]
        %v231 = vld [vmem:[%s165 + $0x138] sm:$0xff]
        %v232 = vld [vmem:[%s165 + $0x140] sm:$0xff]
        %v233 = vld [vmem:[%s165 + $0x148] sm:$0xff]
        %v234 = vld [vmem:[%s165 + $0x150] sm:$0xff]
        %v235 = vld [vmem:[%s165 + $0x158] sm:$0xff]
        %v236 = vld [vmem:[%s165 + $0x160] sm:$0xff]
        %v237 = vld [vmem:[%s165 + $0x168] sm:$0xff]
        %v238 = vld [vmem:[%s165 + $0x170] sm:$0xff]
        %v239 = vld [vmem:[%s165 + $0x178] sm:$0xff]
        %v240 = vld [vmem:[%s165 + $0x180] sm:$0xff]
        %v241 = vld [vmem:[%s165 + $0x188] sm:$0xff]
        %v242 = vld [vmem:[%s165 + $0x190] sm:$0xff]
        %v243 = vld [vmem:[%s165 + $0x198] sm:$0xff]
        %v244 = vld [vmem:[%s165 + $0x1a0] sm:$0xff]
        %v245 = vld [vmem:[%s165 + $0x1a8] sm:$0xff]
        %v246 = vld [vmem:[%s165 + $0x1b0] sm:$0xff]
        %v247 = vld [vmem:[%s165 + $0x1b8] sm:$0xff]
        %v248 = vld [vmem:[%s165 + $0x1c0] sm:$0xff]
        %v249 = vld [vmem:[%s165 + $0x1c8] sm:$0xff]
        %v250 = vld [vmem:[%s165 + $0x1d0] sm:$0xff]
        %v251 = vld [vmem:[%s165 + $0x1d8] sm:$0xff]
        %v252 = vld [vmem:[%s165 + $0x1e0] sm:$0xff]
        %v253 = vld [vmem:[%s165 + $0x1e8] sm:$0xff]
        %v254 = vld [vmem:[%s165 + $0x1f0] sm:$0xff]
        %v255 = vld [vmem:[%s165 + $0x1f8] sm:$0xff]
        %v256 = vld [vmem:[%s1] sm:$0x3]
        %v258 = vlaneseq
        %v259 = vshrl.u32 %v258, 7
        %v260 = vsub.s32 0, %v259
        %v261 = vrot.slane %v256, %v260
        %v262 = vlaneseq
        %v263 = vshrl.u32 %v262, 7
        %v264 = vsub.s32 1, %v263
        %v265 = vrot.slane %v256, %v264
        %v268 = vmul.f32 %v192, %v261
        %v269 = vmul.f32 %v193, %v265
        %v270 = vmul.f32 %v194, %v261
        %v271 = vmul.f32 %v195, %v265
        %v272 = vmul.f32 %v196, %v261
        %v273 = vmul.f32 %v197, %v265
        %v274 = vmul.f32 %v198, %v261
        %v275 = vmul.f32 %v199, %v265
        %v276 = vmul.f32 %v200, %v261
        %v277 = vmul.f32 %v201, %v265
        %v278 = vmul.f32 %v202, %v261
        %v279 = vmul.f32 %v203, %v265
        %v280 = vmul.f32 %v204, %v261
        %v281 = vmul.f32 %v205, %v265
        %v282 = vmul.f32 %v206, %v261
        %v283 = vmul.f32 %v207, %v265
        %v284 = vmul.f32 %v208, %v261
        %v285 = vmul.f32 %v209, %v265
        %v286 = vmul.f32 %v210, %v261
        %v287 = vmul.f32 %v211, %v265
        %v288 = vmul.f32 %v212, %v261
        %v289 = vmul.f32 %v213, %v265
        %v290 = vmul.f32 %v214, %v261
        %v291 = vmul.f32 %v215, %v265
        %v292 = vmul.f32 %v216, %v261
        %v293 = vmul.f32 %v217, %v265
        %v294 = vmul.f32 %v218, %v261
        %v295 = vmul.f32 %v219, %v265
        %v296 = vmul.f32 %v220, %v261
        %v297 = vmul.f32 %v221, %v265
        %v298 = vmul.f32 %v222, %v261
        %v299 = vmul.f32 %v223, %v265
        %v300 = vmul.f32 %v224, %v261
        %v301 = vmul.f32 %v225, %v265
        %v302 = vmul.f32 %v226, %v261
        %v303 = vmul.f32 %v227, %v265
        %v304 = vmul.f32 %v228, %v261
        %v305 = vmul.f32 %v229, %v265
        %v306 = vmul.f32 %v230, %v261
        %v307 = vmul.f32 %v231, %v265
        %v308 = vmul.f32 %v232, %v261
        %v309 = vmul.f32 %v233, %v265
        %v310 = vmul.f32 %v234, %v261
        %v311 = vmul.f32 %v235, %v265
        %v312 = vmul.f32 %v236, %v261
        %v313 = vmul.f32 %v237, %v265
        %v314 = vmul.f32 %v238, %v261
        %v315 = vmul.f32 %v239, %v265
        %v316 = vmul.f32 %v240, %v261
        %v317 = vmul.f32 %v241, %v265
        %v318 = vmul.f32 %v242, %v261
        %v319 = vmul.f32 %v243, %v265
        %v320 = vmul.f32 %v244, %v261
        %v321 = vmul.f32 %v245, %v265
        %v322 = vmul.f32 %v246, %v261
        %v323 = vmul.f32 %v247, %v265
        %v324 = vmul.f32 %v248, %v261
        %v325 = vmul.f32 %v249, %v265
        %v326 = vmul.f32 %v250, %v261
        %v327 = vmul.f32 %v251, %v265
        %v328 = vmul.f32 %v252, %v261
        %v329 = vmul.f32 %v253, %v265
        %v330 = vmul.f32 %v254, %v261
        %v331 = vmul.f32 %v255, %v265
        %v332 = vadd.f32 %v268, %v269
        %333 = vadd.xlane.f32.xlu0 %v332
        %v334 = vpop.xlane.xlu0 %333
        %v335 = vadd.f32 %v270, %v271
        %336 = vadd.xlane.f32.xlu0 %v335
        %v337 = vpop.xlane.xlu0 %336
        %v338 = vadd.f32 %v272, %v273
        %339 = vadd.xlane.f32.xlu0 %v338
        %v340 = vpop.xlane.xlu0 %339
        %v341 = vadd.f32 %v274, %v275
        %342 = vadd.xlane.f32.xlu0 %v341
        %v343 = vpop.xlane.xlu0 %342
        %v344 = vadd.f32 %v276, %v277
        %345 = vadd.xlane.f32.xlu0 %v344
        %v346 = vpop.xlane.xlu0 %345
        %v347 = vadd.f32 %v278, %v279
        %348 = vadd.xlane.f32.xlu0 %v347
        %v349 = vpop.xlane.xlu0 %348
        %v350 = vadd.f32 %v280, %v281
        %351 = vadd.xlane.f32.xlu0 %v350
        %v352 = vpop.xlane.xlu0 %351
        %v353 = vadd.f32 %v282, %v283
        %354 = vadd.xlane.f32.xlu0 %v353
        %v355 = vpop.xlane.xlu0 %354
        %v356 = vadd.f32 %v284, %v285
        %357 = vadd.xlane.f32.xlu0 %v356
        %v358 = vpop.xlane.xlu0 %357
        %v359 = vadd.f32 %v286, %v287
        %360 = vadd.xlane.f32.xlu0 %v359
        %v361 = vpop.xlane.xlu0 %360
        %v362 = vadd.f32 %v288, %v289
        %363 = vadd.xlane.f32.xlu0 %v362
        %v364 = vpop.xlane.xlu0 %363
        %v365 = vadd.f32 %v290, %v291
        %366 = vadd.xlane.f32.xlu0 %v365
        %v367 = vpop.xlane.xlu0 %366
        %v368 = vadd.f32 %v292, %v293
        %369 = vadd.xlane.f32.xlu0 %v368
        %v370 = vpop.xlane.xlu0 %369
        %v371 = vadd.f32 %v294, %v295
        %372 = vadd.xlane.f32.xlu0 %v371
        %v373 = vpop.xlane.xlu0 %372
        %v374 = vadd.f32 %v296, %v297
        %375 = vadd.xlane.f32.xlu0 %v374
        %v376 = vpop.xlane.xlu0 %375
        %v377 = vadd.f32 %v298, %v299
        %378 = vadd.xlane.f32.xlu0 %v377
        %v379 = vpop.xlane.xlu0 %378
        %v380 = vadd.f32 %v300, %v301
        %381 = vadd.xlane.f32.xlu0 %v380
        %v382 = vpop.xlane.xlu0 %381
        %v383 = vadd.f32 %v302, %v303
        %384 = vadd.xlane.f32.xlu0 %v383
        %v385 = vpop.xlane.xlu0 %384
        %v386 = vadd.f32 %v304, %v305
        %387 = vadd.xlane.f32.xlu0 %v386
        %v388 = vpop.xlane.xlu0 %387
        %v389 = vadd.f32 %v306, %v307
        %390 = vadd.xlane.f32.xlu0 %v389
        %v391 = vpop.xlane.xlu0 %390
        %v392 = vadd.f32 %v308, %v309
        %393 = vadd.xlane.f32.xlu0 %v392
        %v394 = vpop.xlane.xlu0 %393
        %v395 = vadd.f32 %v310, %v311
        %396 = vadd.xlane.f32.xlu0 %v395
        %v397 = vpop.xlane.xlu0 %396
        %v398 = vadd.f32 %v312, %v313
        %399 = vadd.xlane.f32.xlu0 %v398
        %v400 = vpop.xlane.xlu0 %399
        %v401 = vadd.f32 %v314, %v315
        %402 = vadd.xlane.f32.xlu0 %v401
        %v403 = vpop.xlane.xlu0 %402
        %v404 = vadd.f32 %v316, %v317
        %405 = vadd.xlane.f32.xlu0 %v404
        %v406 = vpop.xlane.xlu0 %405
        %v407 = vadd.f32 %v318, %v319
        %408 = vadd.xlane.f32.xlu0 %v407
        %v409 = vpop.xlane.xlu0 %408
        %v410 = vadd.f32 %v320, %v321
        %411 = vadd.xlane.f32.xlu0 %v410
        %v412 = vpop.xlane.xlu0 %411
        %v413 = vadd.f32 %v322, %v323
        %414 = vadd.xlane.f32.xlu0 %v413
        %v415 = vpop.xlane.xlu0 %414
        %v416 = vadd.f32 %v324, %v325
        %417 = vadd.xlane.f32.xlu0 %v416
        %v418 = vpop.xlane.xlu0 %417
        %v419 = vadd.f32 %v326, %v327
        %420 = vadd.xlane.f32.xlu0 %v419
        %v421 = vpop.xlane.xlu0 %420
        %v422 = vadd.f32 %v328, %v329
        %423 = vadd.xlane.f32.xlu0 %v422
        %v424 = vpop.xlane.xlu0 %423
        %v425 = vadd.f32 %v330, %v331
        %426 = vadd.xlane.f32.xlu0 %v425
        %v427 = vpop.xlane.xlu0 %426
        %s428 = sld [smem:[#allocation2]]
        %v429 = vstv %s428
        %v430 = vadd.f32 %v334, %v429
        %v431 = vadd.f32 %v337, %v429
        %v432 = vadd.f32 %v340, %v429
        %v433 = vadd.f32 %v343, %v429
        %v434 = vadd.f32 %v346, %v429
        %v435 = vadd.f32 %v349, %v429
        %v436 = vadd.f32 %v352, %v429
        %v437 = vadd.f32 %v355, %v429
        %v438 = vadd.f32 %v358, %v429
        %v439 = vadd.f32 %v361, %v429
        %v440 = vadd.f32 %v364, %v429
        %v441 = vadd.f32 %v367, %v429
        %v442 = vadd.f32 %v370, %v429
        %v443 = vadd.f32 %v373, %v429
        %v444 = vadd.f32 %v376, %v429
        %v445 = vadd.f32 %v379, %v429
        %v446 = vadd.f32 %v382, %v429
        %v447 = vadd.f32 %v385, %v429
        %v448 = vadd.f32 %v388, %v429
        %v449 = vadd.f32 %v391, %v429
        %v450 = vadd.f32 %v394, %v429
        %v451 = vadd.f32 %v397, %v429
        %v452 = vadd.f32 %v400, %v429
        %v453 = vadd.f32 %v403, %v429
        %v454 = vadd.f32 %v406, %v429
        %v455 = vadd.f32 %v409, %v429
        %v456 = vadd.f32 %v412, %v429
        %v457 = vadd.f32 %v415, %v429
        %v458 = vadd.f32 %v418, %v429
        %v459 = vadd.f32 %v421, %v429
        %v460 = vadd.f32 %v424, %v429
        %v461 = vadd.f32 %v427, %v429
        %v462 = vsub.f32 0.0, %v430
        %v463 = vsub.f32 0.0, %v431
        %v464 = vsub.f32 0.0, %v432
        %v465 = vsub.f32 0.0, %v433
        %v466 = vsub.f32 0.0, %v434
        %v467 = vsub.f32 0.0, %v435
        %v468 = vsub.f32 0.0, %v436
        %v469 = vsub.f32 0.0, %v437
        %v470 = vsub.f32 0.0, %v438
        %v471 = vsub.f32 0.0, %v439
        %v472 = vsub.f32 0.0, %v440
        %v473 = vsub.f32 0.0, %v441
        %v474 = vsub.f32 0.0, %v442
        %v475 = vsub.f32 0.0, %v443
        %v476 = vsub.f32 0.0, %v444
        %v477 = vsub.f32 0.0, %v445
        %v478 = vsub.f32 0.0, %v446
        %v479 = vsub.f32 0.0, %v447
        %v480 = vsub.f32 0.0, %v448
        %v481 = vsub.f32 0.0, %v449
        %v482 = vsub.f32 0.0, %v450
        %v483 = vsub.f32 0.0, %v451
        %v484 = vsub.f32 0.0, %v452
        %v485 = vsub.f32 0.0, %v453
        %v486 = vsub.f32 0.0, %v454
        %v487 = vsub.f32 0.0, %v455
        %v488 = vsub.f32 0.0, %v456
        %v489 = vsub.f32 0.0, %v457
        %v490 = vsub.f32 0.0, %v458
        %v491 = vsub.f32 0.0, %v459
        %v492 = vsub.f32 0.0, %v460
        %v493 = vsub.f32 0.0, %v461
        %v494 = vmul.f32 %v462, 1.442695
        %v495 = vpow.pop %v494
        %v496 = vmul.f32 %v463, 1.442695
        %v497 = vpow.pop %v496
        %v498 = vmul.f32 %v464, 1.442695
        %v499 = vpow.pop %v498
        %v500 = vmul.f32 %v465, 1.442695
        %v501 = vpow.pop %v500
        %v502 = vmul.f32 %v466, 1.442695
        %v503 = vpow.pop %v502
        %v504 = vmul.f32 %v467, 1.442695
        %v505 = vpow.pop %v504
        %v506 = vmul.f32 %v468, 1.442695
        %v507 = vpow.pop %v506
        %v508 = vmul.f32 %v469, 1.442695
        %v509 = vpow.pop %v508
        %v510 = vmul.f32 %v470, 1.442695
        %v511 = vpow.pop %v510
        %v512 = vmul.f32 %v471, 1.442695
        %v513 = vpow.pop %v512
        %v514 = vmul.f32 %v472, 1.442695
        %v515 = vpow.pop %v514
        %v516 = vmul.f32 %v473, 1.442695
        %v517 = vpow.pop %v516
        %v518 = vmul.f32 %v474, 1.442695
        %v519 = vpow.pop %v518
        %v520 = vmul.f32 %v475, 1.442695
        %v521 = vpow.pop %v520
        %v522 = vmul.f32 %v476, 1.442695
        %v523 = vpow.pop %v522
        %v524 = vmul.f32 %v477, 1.442695
        %v525 = vpow.pop %v524
        %v526 = vmul.f32 %v478, 1.442695
        %v527 = vpow.pop %v526
        %v528 = vmul.f32 %v479, 1.442695
        %v529 = vpow.pop %v528
        %v530 = vmul.f32 %v480, 1.442695
        %v531 = vpow.pop %v530
        %v532 = vmul.f32 %v481, 1.442695
        %v533 = vpow.pop %v532
        %v534 = vmul.f32 %v482, 1.442695
        %v535 = vpow.pop %v534
        %v536 = vmul.f32 %v483, 1.442695
        %v537 = vpow.pop %v536
        %v538 = vmul.f32 %v484, 1.442695
        %v539 = vpow.pop %v538
        %v540 = vmul.f32 %v485, 1.442695
        %v541 = vpow.pop %v540
        %v542 = vmul.f32 %v486, 1.442695
        %v543 = vpow.pop %v542
        %v544 = vmul.f32 %v487, 1.442695
        %v545 = vpow.pop %v544
        %v546 = vmul.f32 %v488, 1.442695
        %v547 = vpow.pop %v546
        %v548 = vmul.f32 %v489, 1.442695
        %v549 = vpow.pop %v548
        %v550 = vmul.f32 %v490, 1.442695
        %v551 = vpow.pop %v550
        %v552 = vmul.f32 %v491, 1.442695
        %v553 = vpow.pop %v552
        %v554 = vmul.f32 %v492, 1.442695
        %v555 = vpow.pop %v554
        %v556 = vmul.f32 %v493, 1.442695
        %v557 = vpow.pop %v556
        %v558 = vadd.f32 %v495, 1.0
        %v559 = vadd.f32 %v497, 1.0
        %v560 = vadd.f32 %v499, 1.0
        %v561 = vadd.f32 %v501, 1.0
        %v562 = vadd.f32 %v503, 1.0
        %v563 = vadd.f32 %v505, 1.0
        %v564 = vadd.f32 %v507, 1.0
        %v565 = vadd.f32 %v509, 1.0
        %v566 = vadd.f32 %v511, 1.0
        %v567 = vadd.f32 %v513, 1.0
        %v568 = vadd.f32 %v515, 1.0
        %v569 = vadd.f32 %v517, 1.0
        %v570 = vadd.f32 %v519, 1.0
        %v571 = vadd.f32 %v521, 1.0
        %v572 = vadd.f32 %v523, 1.0
        %v573 = vadd.f32 %v525, 1.0
        %v574 = vadd.f32 %v527, 1.0
        %v575 = vadd.f32 %v529, 1.0
        %v576 = vadd.f32 %v531, 1.0
        %v577 = vadd.f32 %v533, 1.0
        %v578 = vadd.f32 %v535, 1.0
        %v579 = vadd.f32 %v537, 1.0
        %v580 = vadd.f32 %v539, 1.0
        %v581 = vadd.f32 %v541, 1.0
        %v582 = vadd.f32 %v543, 1.0
        %v583 = vadd.f32 %v545, 1.0
        %v584 = vadd.f32 %v547, 1.0
        %v585 = vadd.f32 %v549, 1.0
        %v586 = vadd.f32 %v551, 1.0
        %v587 = vadd.f32 %v553, 1.0
        %v588 = vadd.f32 %v555, 1.0
        %v589 = vadd.f32 %v557, 1.0
        %v590 = vrcp.pop %v558
        %v591 = vrcp.pop %v559
        %v592 = vrcp.pop %v560
        %v593 = vrcp.pop %v561
        %v594 = vrcp.pop %v562
        %v595 = vrcp.pop %v563
        %v596 = vrcp.pop %v564
        %v597 = vrcp.pop %v565
        %v598 = vrcp.pop %v566
        %v599 = vrcp.pop %v567
        %v600 = vrcp.pop %v568
        %v601 = vrcp.pop %v569
        %v602 = vrcp.pop %v570
        %v603 = vrcp.pop %v571
        %v604 = vrcp.pop %v572
        %v605 = vrcp.pop %v573
        %v606 = vrcp.pop %v574
        %v607 = vrcp.pop %v575
        %v608 = vrcp.pop %v576
        %v609 = vrcp.pop %v577
        %v610 = vrcp.pop %v578
        %v611 = vrcp.pop %v579
        %v612 = vrcp.pop %v580
        %v613 = vrcp.pop %v581
        %v614 = vrcp.pop %v582
        %v615 = vrcp.pop %v583
        %v616 = vrcp.pop %v584
        %v617 = vrcp.pop %v585
        %v618 = vrcp.pop %v586
        %v619 = vrcp.pop %v587
        %v620 = vrcp.pop %v588
        %v621 = vrcp.pop %v589
        %v654 = vlaneseq
        %v655 = vand.u32 %v654, 127
        %v656 = vlaneseq
        %v657 = vshrl.u32 %v656, 7
        %v658 = vsub.s32 %v655, %v657
        %v659 = vrot.slane %v590, %v658
        %v660 = vadd.s32 %v655, 4294967288
        %v661 = vlaneseq
        %v662 = vshrl.u32 %v661, 7
        %v663 = vsub.s32 %v660, %v662
        %v664 = vrot.slane %v591, %v663
        %vm665 = vcmask 130112
        %v666 = vsel %vm665, %v664, %v659
        %v667 = vadd.s32 %v655, 4294967280
        %v668 = vlaneseq
        %v669 = vshrl.u32 %v668, 7
        %v670 = vsub.s32 %v667, %v669
        %v671 = vrot.slane %v592, %v670
        %vm672 = vcmask 195712
        %v673 = vsel %vm672, %v671, %v666
        %v674 = vadd.s32 %v655, 4294967272
        %v675 = vlaneseq
        %v676 = vshrl.u32 %v675, 7
        %v677 = vsub.s32 %v674, %v676
        %v678 = vrot.slane %v593, %v677
        %vm679 = vcmask 261312
        %v680 = vsel %vm679, %v678, %v673
        %v681 = vadd.s32 %v655, 4294967264
        %v682 = vlaneseq
        %v683 = vshrl.u32 %v682, 7
        %v684 = vsub.s32 %v681, %v683
        %v685 = vrot.slane %v594, %v684
        %vm686 = vcmask 326912
        %v687 = vsel %vm686, %v685, %v680
        %v688 = vadd.s32 %v655, 4294967256
        %v689 = vlaneseq
        %v690 = vshrl.u32 %v689, 7
        %v691 = vsub.s32 %v688, %v690
        %v692 = vrot.slane %v595, %v691
        %vm693 = vcmask 392512
        %v694 = vsel %vm693, %v692, %v687
        %v695 = vadd.s32 %v655, 4294967248
        %v696 = vlaneseq
        %v697 = vshrl.u32 %v696, 7
        %v698 = vsub.s32 %v695, %v697
        %v699 = vrot.slane %v596, %v698
        %vm700 = vcmask 458112
        %v701 = vsel %vm700, %v699, %v694
        %v702 = vadd.s32 %v655, 4294967240
        %v703 = vlaneseq
        %v704 = vshrl.u32 %v703, 7
        %v705 = vsub.s32 %v702, %v704
        %v706 = vrot.slane %v597, %v705
        %vm707 = vcmask 523712
        %v708 = vsel %vm707, %v706, %v701
        %v709 = vadd.s32 %v655, 4294967232
        %v710 = vlaneseq
        %v711 = vshrl.u32 %v710, 7
        %v712 = vsub.s32 %v709, %v711
        %v713 = vrot.slane %v598, %v712
        %vm714 = vcmask 589312
        %v715 = vsel %vm714, %v713, %v708
        %v716 = vadd.s32 %v655, 4294967224
        %v717 = vlaneseq
        %v718 = vshrl.u32 %v717, 7
        %v719 = vsub.s32 %v716, %v718
        %v720 = vrot.slane %v599, %v719
        %vm721 = vcmask 654912
        %v722 = vsel %vm721, %v720, %v715
        %v723 = vadd.s32 %v655, 4294967216
        %v724 = vlaneseq
        %v725 = vshrl.u32 %v724, 7
        %v726 = vsub.s32 %v723, %v725
        %v727 = vrot.slane %v600, %v726
        %vm728 = vcmask 720512
        %v729 = vsel %vm728, %v727, %v722
        %v730 = vadd.s32 %v655, 4294967208
        %v731 = vlaneseq
        %v732 = vshrl.u32 %v731, 7
        %v733 = vsub.s32 %v730, %v732
        %v734 = vrot.slane %v601, %v733
        %vm735 = vcmask 786112
        %v736 = vsel %vm735, %v734, %v729
        %v737 = vadd.s32 %v655, 4294967200
        %v738 = vlaneseq
        %v739 = vshrl.u32 %v738, 7
        %v740 = vsub.s32 %v737, %v739
        %v741 = vrot.slane %v602, %v740
        %vm742 = vcmask 851712
        %v743 = vsel %vm742, %v741, %v736
        %v744 = vadd.s32 %v655, 4294967192
        %v745 = vlaneseq
        %v746 = vshrl.u32 %v745, 7
        %v747 = vsub.s32 %v744, %v746
        %v748 = vrot.slane %v603, %v747
        %vm749 = vcmask 917312
        %v750 = vsel %vm749, %v748, %v743
        %v751 = vadd.s32 %v655, 4294967184
        %v752 = vlaneseq
        %v753 = vshrl.u32 %v752, 7
        %v754 = vsub.s32 %v751, %v753
        %v755 = vrot.slane %v604, %v754
        %vm756 = vcmask 982912
        %v757 = vsel %vm756, %v755, %v750
        %v758 = vadd.s32 %v655, 4294967176
        %v759 = vlaneseq
        %v760 = vshrl.u32 %v759, 7
        %v761 = vsub.s32 %v758, %v760
        %v762 = vrot.slane %v605, %v761
        %vm763 = vcmask 1048512
        %v764 = vsel %vm763, %v762, %v757
        %v765 = vlaneseq
        %v766 = vshrl.u32 %v765, 7
        %v767 = vsub.s32 %v655, %v766
        %v768 = vrot.slane %v606, %v767
        %v769 = vlaneseq
        %v770 = vshrl.u32 %v769, 7
        %v771 = vsub.s32 %v660, %v770
        %v772 = vrot.slane %v607, %v771
        %v773 = vsel %vm665, %v772, %v768
        %v774 = vlaneseq
        %v775 = vshrl.u32 %v774, 7
        %v776 = vsub.s32 %v667, %v775
        %v777 = vrot.slane %v608, %v776
        %v778 = vsel %vm672, %v777, %v773
        %v779 = vlaneseq
        %v780 = vshrl.u32 %v779, 7
        %v781 = vsub.s32 %v674, %v780
        %v782 = vrot.slane %v609, %v781
        %v783 = vsel %vm679, %v782, %v778
        %v784 = vlaneseq
        %v785 = vshrl.u32 %v784, 7
        %v786 = vsub.s32 %v681, %v785
        %v787 = vrot.slane %v610, %v786
        %v788 = vsel %vm686, %v787, %v783
        %v789 = vlaneseq
        %v790 = vshrl.u32 %v789, 7
        %v791 = vsub.s32 %v688, %v790
        %v792 = vrot.slane %v611, %v791
        %v793 = vsel %vm693, %v792, %v788
        %v794 = vlaneseq
        %v795 = vshrl.u32 %v794, 7
        %v796 = vsub.s32 %v695, %v795
        %v797 = vrot.slane %v612, %v796
        %v798 = vsel %vm700, %v797, %v793
        %v799 = vlaneseq
        %v800 = vshrl.u32 %v799, 7
        %v801 = vsub.s32 %v702, %v800
        %v802 = vrot.slane %v613, %v801
        %v803 = vsel %vm707, %v802, %v798
        %v804 = vlaneseq
        %v805 = vshrl.u32 %v804, 7
        %v806 = vsub.s32 %v709, %v805
        %v807 = vrot.slane %v614, %v806
        %v808 = vsel %vm714, %v807, %v803
        %v809 = vlaneseq
        %v810 = vshrl.u32 %v809, 7
        %v811 = vsub.s32 %v716, %v810
        %v812 = vrot.slane %v615, %v811
        %v813 = vsel %vm721, %v812, %v808
        %v814 = vlaneseq
        %v815 = vshrl.u32 %v814, 7
        %v816 = vsub.s32 %v723, %v815
        %v817 = vrot.slane %v616, %v816
        %v818 = vsel %vm728, %v817, %v813
        %v819 = vlaneseq
        %v820 = vshrl.u32 %v819, 7
        %v821 = vsub.s32 %v730, %v820
        %v822 = vrot.slane %v617, %v821
        %v823 = vsel %vm735, %v822, %v818
        %v824 = vlaneseq
        %v825 = vshrl.u32 %v824, 7
        %v826 = vsub.s32 %v737, %v825
        %v827 = vrot.slane %v618, %v826
        %v828 = vsel %vm742, %v827, %v823
        %v829 = vlaneseq
        %v830 = vshrl.u32 %v829, 7
        %v831 = vsub.s32 %v744, %v830
        %v832 = vrot.slane %v619, %v831
        %v833 = vsel %vm749, %v832, %v828
        %v834 = vlaneseq
        %v835 = vshrl.u32 %v834, 7
        %v836 = vsub.s32 %v751, %v835
        %v837 = vrot.slane %v620, %v836
        %v838 = vsel %vm756, %v837, %v833
        %v839 = vlaneseq
        %v840 = vshrl.u32 %v839, 7
        %v841 = vsub.s32 %v758, %v840
        %v842 = vrot.slane %v621, %v841
        %v843 = vsel %vm763, %v842, %v838
        %vm844 = vcmask 1041409
        %v845 = vsel %vm844, %v843, %v764
        %847 = vst [vmem:[%s191] sm:$0x3] %v845
        %p848 = scmp.lt.s32.totalorder %s18, 3
        %s849 = scalar_select %p848, %s18, 3
        %s850 = smul.addr %s849, 2
        %s851 = scalar_lea.vmem %s3, %s850
        // Predicated region
        $region37: #{token_confidence.2} parent=31 // pred_check
          %p852 = pneg %p104
        $region38: #{token_confidence.2} parent=31 // pred_check_branch
          %854 = sbr.rel (%p852) target = $region40
        $region39: #{token_confidence.2} parent=31 // pred_region
          _
        $region40: #{token_confidence.2} parent=31 // pred_fallthru
          _
      $region32: #{token_confidence.2} parent=5 // pred_fallthru
        _
      %p855 = scmp.le.s32.totalorder 2, %s13
      // Predicated region
      $region41: #{token_confidence.2} parent=5 // pred_check
        %p856 = pneg %p855
      $region42: #{token_confidence.2} parent=5 // pred_check_branch
        %858 = sbr.rel (%p856) target = $region44
      $region43: #{token_confidence.2} parent=5 // pred_region
        %s859 = ssub.s32 %s13, 2
        // Predicated region
        $region45: #{token_confidence.2} parent=43 // pred_check
          %p860 = pneg %p110
        $region46: #{token_confidence.2} parent=43 // pred_check_branch
          %862 = sbr.rel (%p860) target = $region48
        $region47: #{token_confidence.2} parent=43 // pred_region
          %p863 = scmp.lt.s32.totalorder %s19, 3
          %s864 = scalar_select %p863, %s19, 3
          %s865 = smul.addr %s864, 2
          %s866 = scalar_lea.vmem %s3, %s865
        $region48: #{token_confidence.2} parent=43 // pred_fallthru
          _
      $region44: #{token_confidence.2} parent=5 // pred_fallthru
        _
    $region6: #{token_confidence.2} parent=1 // loop_footer
      %s17 = sadd.s32 1, %s13
    $region7: #{token_confidence.2} parent=1 // loop_footer_branch
      %12 = sbr.rel target = $region3
    $region8: #{token_confidence.2} parent=1 // loop_exit
      _
    %867 = vsyncpa [#allocation4], 1
    %s868 = scalar_lea.sflag [#allocation4], 1
    %869 = vsyncpa %s868, 1

// kernel: token_confidence.3
$region0: #{token_confidence.3}
  #allocation0 [shape = 'u32[]', space=smem, size = 0x4, offset = 0x4, fixed_abs, tag = 'smem constant byte address 0x4 - core index']
  #allocation1 [shape = 'u32[144,128]{1,0:T(1,128)}', space=vmem, size = 0x12000, scoped, tag = 'internal scratch']
  #allocation2 [shape = 'f32[1]{0:T(128)S(6)}', space=smem, size = 0x200, scoped, tag = 'scoped memory for token_confidence.3']
  %s0 = inlined_call_operand.vmem [shape: f32[768,256], index: 0, kind: input, shape index: {}]
  %s1 = inlined_call_operand.vmem [shape: f32[1,256], index: 1, kind: input, shape index: {}]
  %s2 = inlined_call_operand.<no memory space> [shape: f32[1], index: 2, kind: input, shape index: {}]
  %s3 = inlined_call_operand.vmem [shape: f32[2,3,128], index: 3, kind: output, shape index: {}]
  %s4 = sld [smem:[#allocation0]]
  $region45: #{token_confidence.3} parent=0
    _
  %s6 = ssub.s32 1, %s4
  %s7 = scalar_select 0, %s6, %s4
  %8 = sst [smem:[#allocation2]] %s2
  loop: start=0, step=1, limit=4
  $region2: #{token_confidence.3} parent=0 // loop_pre_header
    _
  $region3: #{token_confidence.3} parent=0 // loop_header
    %s10 = sphi 0, %s14
    %p11 = scmp.ge.s32.totalorder %s10, 4
    %s20 = sphi 0, %s22
    %s23 = sphi 0, %s20
    %s24 = sphi 0, %s23
    %s40 = sphi 0, %s24
    %s44 = sphi 0, %s44
    %s46 = sphi 0, %s44
    %s47 = sphi 0, %s46
    %s61 = sphi 0, %s47
    %s65 = sphi 0, %s65
    %s67 = sphi 0, %s65
    %s68 = sphi 0, %s67
    %s82 = sphi 0, %s68
    %s88 = sphi 0, %s90
    %s91 = sphi 0, %s88
    %s92 = sphi 0, %s91
    %s108 = sphi 0, %s92
  $region4: #{token_confidence.3} parent=0 // loop_header_branch
    %13 = sbr.rel (%p11) target = $region8
  $region5: #{token_confidence.3} parent=0 // loop_body
    %s15 = ssub.s32 %s10, 1
    %s16 = ssub.s32 %s10, 2
    %s17 = sadd.s32 %s10, 1
    %s18 = ssub.s32 %s10, %s17
    %p19 = scmp.eq.s32.totalorder %s18, 0
    %s21 = sadd.s32 %s20, 1
    %s22 = scalar_select %p19, %s20, %s21
    %p25 = pneg %p19
    %p26 = scmp.eq.s32.totalorder %s10, 1
    %p27 = por %p25, %p26
    %p28 = scmp.ne.s32.totalorder %s20, %s23
    %p29 = scmp.eq.s32.totalorder %s10, 0
    %p30 = por %p28, %p29
    %p31 = scmp.ne.s32.totalorder %s20, %s23
    %p32 = scmp.eq.s32.totalorder %s15, 1
    %p33 = por %p31, %p32
    %p34 = scmp.ne.s32.totalorder %s23, %s24
    %p35 = scmp.eq.s32.totalorder %s15, 0
    %p36 = por %p34, %p35
    %p37 = scmp.ne.s32.totalorder %s23, %s24
    %p38 = scmp.eq.s32.totalorder %s16, 1
    %p39 = por %p37, %p38
    %p41 = scmp.ne.s32.totalorder %s24, %s40
    %p42 = scmp.eq.s32.totalorder %s16, 0
    %p43 = por %p41, %p42
    %s45 = sadd.s32 %s44, 1
    %p48 = scmp.eq.s32.totalorder %s10, 1
    %p49 = scmp.ne.s32.totalorder %s44, %s46
    %p50 = scmp.eq.s32.totalorder %s10, 0
    %p51 = por %p49, %p50
    %p52 = scmp.ne.s32.totalorder %s44, %s46
    %p53 = scmp.eq.s32.totalorder %s15, 1
    %p54 = por %p52, %p53
    %p55 = scmp.ne.s32.totalorder %s46, %s47
    %p56 = scmp.eq.s32.totalorder %s15, 0
    %p57 = por %p55, %p56
    %p58 = scmp.ne.s32.totalorder %s46, %s47
    %p59 = scmp.eq.s32.totalorder %s16, 1
    %p60 = por %p58, %p59
    %p62 = scmp.ne.s32.totalorder %s47, %s61
    %p63 = scmp.eq.s32.totalorder %s16, 0
    %p64 = por %p62, %p63
    %s66 = sadd.s32 %s65, 1
    %p69 = scmp.eq.s32.totalorder %s10, 1
    %p70 = scmp.ne.s32.totalorder %s65, %s67
    %p71 = scmp.eq.s32.totalorder %s10, 0
    %p72 = por %p70, %p71
    %p73 = scmp.ne.s32.totalorder %s65, %s67
    %p74 = scmp.eq.s32.totalorder %s15, 1
    %p75 = por %p73, %p74
    %p76 = scmp.ne.s32.totalorder %s67, %s68
    %p77 = scmp.eq.s32.totalorder %s15, 0
    %p78 = por %p76, %p77
    %p79 = scmp.ne.s32.totalorder %s67, %s68
    %p80 = scmp.eq.s32.totalorder %s16, 1
    %p81 = por %p79, %p80
    %p83 = scmp.ne.s32.totalorder %s68, %s82
    %p84 = scmp.eq.s32.totalorder %s16, 0
    %p85 = por %p83, %p84
    %s86 = ssub.s32 %s10, %s17
    %p87 = scmp.eq.s32.totalorder %s86, 0
    %s89 = sadd.s32 %s88, 1
    %s90 = scalar_select %p87, %s88, %s89
    %p93 = pneg %p87
    %p94 = scmp.eq.s32.totalorder %s10, 1
    %p95 = por %p93, %p94
    %p96 = scmp.ne.s32.totalorder %s88, %s91
    %p97 = scmp.eq.s32.totalorder %s10, 0
    %p98 = por %p96, %p97
    %p99 = scmp.ne.s32.totalorder %s88, %s91
    %p100 = scmp.eq.s32.totalorder %s15, 1
    %p101 = por %p99, %p100
    %p102 = scmp.ne.s32.totalorder %s91, %s92
    %p103 = scmp.eq.s32.totalorder %s15, 0
    %p104 = por %p102, %p103
    %p105 = scmp.ne.s32.totalorder %s91, %s92
    %p106 = scmp.eq.s32.totalorder %s16, 1
    %p107 = por %p105, %p106
    %p109 = scmp.ne.s32.totalorder %s92, %s108
    %p110 = scmp.eq.s32.totalorder %s16, 0
    %p111 = por %p109, %p110
    %p112 = scmp.le.s32.totalorder 1, %s10
    %p113 = scmp.lt.s32.totalorder %s10, 3
    %p114 = pnand %p112, %p113
    %p115 = pneg %p114
    // Predicated region
    $region9: #{token_confidence.3} parent=5 // pred_check
      _
    $region10: #{token_confidence.3} parent=5 // pred_check_branch
      %117 = sbr.rel (%p114) target = $region12
    $region11: #{token_confidence.3} parent=5 // pred_region
      %s118 = ssub.s32 %s10, 1
      // Predicated region
      $region13: #{token_confidence.3} parent=11 // pred_check
        %p119 = pneg %p57
      $region14: #{token_confidence.3} parent=11 // pred_check_branch
        %121 = sbr.rel (%p119) target = $region16
      $region15: #{token_confidence.3} parent=11 // pred_region
        _
      $region16: #{token_confidence.3} parent=11 // pred_fallthru
        _
      // Predicated region
      $region17: #{token_confidence.3} parent=11 // pred_check
        %p122 = pneg %p78
      $region18: #{token_confidence.3} parent=11 // pred_check_branch
        %124 = sbr.rel (%p122) target = $region20
      $region19: #{token_confidence.3} parent=11 // pred_region
        _
      $region20: #{token_confidence.3} parent=11 // pred_fallthru
        _
    $region12: #{token_confidence.3} parent=5 // pred_fallthru
      _
    %p125 = scmp.lt.s32.totalorder %s10, 2
    // Predicated region
    $region21: #{token_confidence.3} parent=5 // pred_check
      %p126 = pneg %p125
    $region22: #{token_confidence.3} parent=5 // pred_check_branch
      %128 = sbr.rel (%p126) target = $region24
    $region23: #{token_confidence.3} parent=5 // pred_region
      // Predicated region
      $region25: #{token_confidence.3} parent=23 // pred_check
        %p129 = pneg %p30
      $region26: #{token_confidence.3} parent=23 // pred_check_branch
        %131 = sbr.rel (%p129) target = $region28
      $region27: #{token_confidence.3} parent=23 // pred_region
        %s132 = smul.u32 48, %s10
        %p133 = scmp.lt.s32.totalorder %s132, 95
        %s134 = scalar_select %p133, %s132, 95
        %s135 = smul.addr %s134, 2
        %s136 = smul.addr %s135, 8
        %s137 = scalar_lea.vmem %s0, %s136
        %s138 = smul.u32 48, %s10
      $region28: #{token_confidence.3} parent=23 // pred_fallthru
        _
    $region24: #{token_confidence.3} parent=5 // pred_fallthru
      _
    %p139 = scmp.le.s32.totalorder 1, %s10
    %p140 = scmp.lt.s32.totalorder %s10, 3
    %p141 = pnand %p139, %p140
    %p142 = pneg %p141
    // Predicated region
    $region29: #{token_confidence.3} parent=5 // pred_check
      _
    $region30: #{token_confidence.3} parent=5 // pred_check_branch
      %144 = sbr.rel (%p141) target = $region32
    $region31: #{token_confidence.3} parent=5 // pred_region
      %s145 = ssub.s32 %s10, 1
      %s146 = smul.u32 48, %s15
      %p147 = scmp.lt.s32.totalorder %s146, 95
      %s148 = scalar_select %p147, %s146, 95
      %s149 = smul.addr %s148, 2
      %s150 = smul.addr %s149, 8
      %s151 = scalar_lea.vmem %s0, %s150
      %p152 = pneg %p36
      %p153 = pneg %p33
      %p154 = pneg %p57
      %p155 = pneg %p54
      %p156 = pneg %p78
      %p157 = pneg %p75
      %p158 = pneg %p104
      %p159 = pneg %p101
      %p160 = scmp.lt.s32.totalorder %s15, 1
      %s161 = scalar_select %p160, %s15, 1
      %s162 = smul.addr %s161, 4
      %s163 = scalar_lea.vmem %s3, %s162
      %s164 = smul.u32 48, %s15
      %p165 = scmp.lt.s32.totalorder %s164, 95
      %s166 = scalar_select %p165, %s164, 95
      %s167 = smul.addr %s166, 2
      %s168 = smul.addr %s167, 8
      %s169 = scalar_lea.vmem %s0, %s168
      %s170 = smul.u32 48, %s15
      %p171 = scmp.lt.s32.totalorder %s15, 1
      %s172 = scalar_select %p171, %s15, 1
      %s173 = smul.addr %s172, 4
      %s174 = scalar_lea.vmem %s3, %s173
      %v175 = vld [vmem:[%s169] sm:$0xff]
      %v176 = vld [vmem:[%s169 + $0x8] sm:$0xff]
      %v177 = vld [vmem:[%s169 + $0x10] sm:$0xff]
      %v178 = vld [vmem:[%s169 + $0x18] sm:$0xff]
      %v179 = vld [vmem:[%s169 + $0x20] sm:$0xff]
      %v180 = vld [vmem:[%s169 + $0x28] sm:$0xff]
      %v181 = vld [vmem:[%s169 + $0x30] sm:$0xff]
      %v182 = vld [vmem:[%s169 + $0x38] sm:$0xff]
      %v183 = vld [vmem:[%s169 + $0x40] sm:$0xff]
      %v184 = vld [vmem:[%s169 + $0x48] sm:$0xff]
      %v185 = vld [vmem:[%s169 + $0x50] sm:$0xff]
      %v186 = vld [vmem:[%s169 + $0x58] sm:$0xff]
      %v187 = vld [vmem:[%s169 + $0x60] sm:$0xff]
      %v188 = vld [vmem:[%s169 + $0x68] sm:$0xff]
      %v189 = vld [vmem:[%s169 + $0x70] sm:$0xff]
      %v190 = vld [vmem:[%s169 + $0x78] sm:$0xff]
      %v191 = vld [vmem:[%s169 + $0x80] sm:$0xff]
      %v192 = vld [vmem:[%s169 + $0x88] sm:$0xff]
      %v193 = vld [vmem:[%s169 + $0x90] sm:$0xff]
      %v194 = vld [vmem:[%s169 + $0x98] sm:$0xff]
      %v195 = vld [vmem:[%s169 + $0xa0] sm:$0xff]
      %v196 = vld [vmem:[%s169 + $0xa8] sm:$0xff]
      %v197 = vld [vmem:[%s169 + $0xb0] sm:$0xff]
      %v198 = vld [vmem:[%s169 + $0xb8] sm:$0xff]
      %v199 = vld [vmem:[%s169 + $0xc0] sm:$0xff]
      %v200 = vld [vmem:[%s169 + $0xc8] sm:$0xff]
      %v201 = vld [vmem:[%s169 + $0xd0] sm:$0xff]
      %v202 = vld [vmem:[%s169 + $0xd8] sm:$0xff]
      %v203 = vld [vmem:[%s169 + $0xe0] sm:$0xff]
      %v204 = vld [vmem:[%s169 + $0xe8] sm:$0xff]
      %v205 = vld [vmem:[%s169 + $0xf0] sm:$0xff]
      %v206 = vld [vmem:[%s169 + $0xf8] sm:$0xff]
      %v207 = vld [vmem:[%s169 + $0x100] sm:$0xff]
      %v208 = vld [vmem:[%s169 + $0x108] sm:$0xff]
      %v209 = vld [vmem:[%s169 + $0x110] sm:$0xff]
      %v210 = vld [vmem:[%s169 + $0x118] sm:$0xff]
      %v211 = vld [vmem:[%s169 + $0x120] sm:$0xff]
      %v212 = vld [vmem:[%s169 + $0x128] sm:$0xff]
      %v213 = vld [vmem:[%s169 + $0x130] sm:$0xff]
      %v214 = vld [vmem:[%s169 + $0x138] sm:$0xff]
      %v215 = vld [vmem:[%s169 + $0x140] sm:$0xff]
      %v216 = vld [vmem:[%s169 + $0x148] sm:$0xff]
      %v217 = vld [vmem:[%s169 + $0x150] sm:$0xff]
      %v218 = vld [vmem:[%s169 + $0x158] sm:$0xff]
      %v219 = vld [vmem:[%s169 + $0x160] sm:$0xff]
      %v220 = vld [vmem:[%s169 + $0x168] sm:$0xff]
      %v221 = vld [vmem:[%s169 + $0x170] sm:$0xff]
      %v222 = vld [vmem:[%s169 + $0x178] sm:$0xff]
      %v223 = vld [vmem:[%s169 + $0x180] sm:$0xff]
      %v224 = vld [vmem:[%s169 + $0x188] sm:$0xff]
      %v225 = vld [vmem:[%s169 + $0x190] sm:$0xff]
      %v226 = vld [vmem:[%s169 + $0x198] sm:$0xff]
      %v227 = vld [vmem:[%s169 + $0x1a0] sm:$0xff]
      %v228 = vld [vmem:[%s169 + $0x1a8] sm:$0xff]
      %v229 = vld [vmem:[%s169 + $0x1b0] sm:$0xff]
      %v230 = vld [vmem:[%s169 + $0x1b8] sm:$0xff]
      %v231 = vld [vmem:[%s169 + $0x1c0] sm:$0xff]
      %v232 = vld [vmem:[%s169 + $0x1c8] sm:$0xff]
      %v233 = vld [vmem:[%s169 + $0x1d0] sm:$0xff]
      %v234 = vld [vmem:[%s169 + $0x1d8] sm:$0xff]
      %v235 = vld [vmem:[%s169 + $0x1e0] sm:$0xff]
      %v236 = vld [vmem:[%s169 + $0x1e8] sm:$0xff]
      %v237 = vld [vmem:[%s169 + $0x1f0] sm:$0xff]
      %v238 = vld [vmem:[%s169 + $0x1f8] sm:$0xff]
      %v239 = vld [vmem:[%s169 + $0x200] sm:$0xff]
      %v240 = vld [vmem:[%s169 + $0x208] sm:$0xff]
      %v241 = vld [vmem:[%s169 + $0x210] sm:$0xff]
      %v242 = vld [vmem:[%s169 + $0x218] sm:$0xff]
      %v243 = vld [vmem:[%s169 + $0x220] sm:$0xff]
      %v244 = vld [vmem:[%s169 + $0x228] sm:$0xff]
      %v245 = vld [vmem:[%s169 + $0x230] sm:$0xff]
      %v246 = vld [vmem:[%s169 + $0x238] sm:$0xff]
      %v247 = vld [vmem:[%s169 + $0x240] sm:$0xff]
      %v248 = vld [vmem:[%s169 + $0x248] sm:$0xff]
      %v249 = vld [vmem:[%s169 + $0x250] sm:$0xff]
      %v250 = vld [vmem:[%s169 + $0x258] sm:$0xff]
      %v251 = vld [vmem:[%s169 + $0x260] sm:$0xff]
      %v252 = vld [vmem:[%s169 + $0x268] sm:$0xff]
      %v253 = vld [vmem:[%s169 + $0x270] sm:$0xff]
      %v254 = vld [vmem:[%s169 + $0x278] sm:$0xff]
      %v255 = vld [vmem:[%s169 + $0x280] sm:$0xff]
      %v256 = vld [vmem:[%s169 + $0x288] sm:$0xff]
      %v257 = vld [vmem:[%s169 + $0x290] sm:$0xff]
      %v258 = vld [vmem:[%s169 + $0x298] sm:$0xff]
      %v259 = vld [vmem:[%s169 + $0x2a0] sm:$0xff]
      %v260 = vld [vmem:[%s169 + $0x2a8] sm:$0xff]
      %v261 = vld [vmem:[%s169 + $0x2b0] sm:$0xff]
      %v262 = vld [vmem:[%s169 + $0x2b8] sm:$0xff]
      %v263 = vld [vmem:[%s169 + $0x2c0] sm:$0xff]
      %v264 = vld [vmem:[%s169 + $0x2c8] sm:$0xff]
      %v265 = vld [vmem:[%s169 + $0x2d0] sm:$0xff]
      %v266 = vld [vmem:[%s169 + $0x2d8] sm:$0xff]
      %v267 = vld [vmem:[%s169 + $0x2e0] sm:$0xff]
      %v268 = vld [vmem:[%s169 + $0x2e8] sm:$0xff]
      %v269 = vld [vmem:[%s169 + $0x2f0] sm:$0xff]
      %v270 = vld [vmem:[%s169 + $0x2f8] sm:$0xff]
      %v271 = vld [vmem:[%s1] sm:$0x3]
      %v273 = vlaneseq
      %v274 = vshrl.u32 %v273, 7
      %v275 = vsub.s32 0, %v274
      %v276 = vrot.slane %v271, %v275
      %v277 = vlaneseq
      %v278 = vshrl.u32 %v277, 7
      %v279 = vsub.s32 1, %v278
      %v280 = vrot.slane %v271, %v279
      %v283 = vmul.f32 %v175, %v276
      %v284 = vmul.f32 %v176, %v280
      %v285 = vmul.f32 %v177, %v276
      %v286 = vmul.f32 %v178, %v280
      %v287 = vmul.f32 %v179, %v276
      %v288 = vmul.f32 %v180, %v280
      %v289 = vmul.f32 %v181, %v276
      %v290 = vmul.f32 %v182, %v280
      %v291 = vmul.f32 %v183, %v276
      %v292 = vmul.f32 %v184, %v280
      %v293 = vmul.f32 %v185, %v276
      %v294 = vmul.f32 %v186, %v280
      %v295 = vmul.f32 %v187, %v276
      %v296 = vmul.f32 %v188, %v280
      %v297 = vmul.f32 %v189, %v276
      %v298 = vmul.f32 %v190, %v280
      %v299 = vmul.f32 %v191, %v276
      %v300 = vmul.f32 %v192, %v280
      %v301 = vmul.f32 %v193, %v276
      %v302 = vmul.f32 %v194, %v280
      %v303 = vmul.f32 %v195, %v276
      %v304 = vmul.f32 %v196, %v280
      %v305 = vmul.f32 %v197, %v276
      %v306 = vmul.f32 %v198, %v280
      %v307 = vmul.f32 %v199, %v276
      %v308 = vmul.f32 %v200, %v280
      %v309 = vmul.f32 %v201, %v276
      %v310 = vmul.f32 %v202, %v280
      %v311 = vmul.f32 %v203, %v276
      %v312 = vmul.f32 %v204, %v280
      %v313 = vmul.f32 %v205, %v276
      %v314 = vmul.f32 %v206, %v280
      %v315 = vmul.f32 %v207, %v276
      %v316 = vmul.f32 %v208, %v280
      %v317 = vmul.f32 %v209, %v276
      %v318 = vmul.f32 %v210, %v280
      %v319 = vmul.f32 %v211, %v276
      %v320 = vmul.f32 %v212, %v280
      %v321 = vmul.f32 %v213, %v276
      %v322 = vmul.f32 %v214, %v280
      %v323 = vmul.f32 %v215, %v276
      %v324 = vmul.f32 %v216, %v280
      %v325 = vmul.f32 %v217, %v276
      %v326 = vmul.f32 %v218, %v280
      %v327 = vmul.f32 %v219, %v276
      %v328 = vmul.f32 %v220, %v280
      %v329 = vmul.f32 %v221, %v276
      %v330 = vmul.f32 %v222, %v280
      %v331 = vmul.f32 %v223, %v276
      %v332 = vmul.f32 %v224, %v280
      %v333 = vmul.f32 %v225, %v276
      %v334 = vmul.f32 %v226, %v280
      %v335 = vmul.f32 %v227, %v276
      %v336 = vmul.f32 %v228, %v280
      %v337 = vmul.f32 %v229, %v276
      %v338 = vmul.f32 %v230, %v280
      %v339 = vmul.f32 %v231, %v276
      %v340 = vmul.f32 %v232, %v280
      %v341 = vmul.f32 %v233, %v276
      %v342 = vmul.f32 %v234, %v280
      %v343 = vmul.f32 %v235, %v276
      %v344 = vmul.f32 %v236, %v280
      %v345 = vmul.f32 %v237, %v276
      %v346 = vmul.f32 %v238, %v280
      %v347 = vmul.f32 %v239, %v276
      %v348 = vmul.f32 %v240, %v280
      %v349 = vmul.f32 %v241, %v276
      %v350 = vmul.f32 %v242, %v280
      %v351 = vmul.f32 %v243, %v276
      %v352 = vmul.f32 %v244, %v280
      %v353 = vmul.f32 %v245, %v276
      %v354 = vmul.f32 %v246, %v280
      %v355 = vmul.f32 %v247, %v276
      %v356 = vmul.f32 %v248, %v280
      %v357 = vmul.f32 %v249, %v276
      %v358 = vmul.f32 %v250, %v280
      %v359 = vmul.f32 %v251, %v276
      %v360 = vmul.f32 %v252, %v280
      %v361 = vmul.f32 %v253, %v276
      %v362 = vmul.f32 %v254, %v280
      %v363 = vmul.f32 %v255, %v276
      %v364 = vmul.f32 %v256, %v280
      %v365 = vmul.f32 %v257, %v276
      %v366 = vmul.f32 %v258, %v280
      %v367 = vmul.f32 %v259, %v276
      %v368 = vmul.f32 %v260, %v280
      %v369 = vmul.f32 %v261, %v276
      %v370 = vmul.f32 %v262, %v280
      %v371 = vmul.f32 %v263, %v276
      %v372 = vmul.f32 %v264, %v280
      %v373 = vmul.f32 %v265, %v276
      %v374 = vmul.f32 %v266, %v280
      %v375 = vmul.f32 %v267, %v276
      %v376 = vmul.f32 %v268, %v280
      %v377 = vmul.f32 %v269, %v276
      %v378 = vmul.f32 %v270, %v280
      %v379 = vadd.f32 %v283, %v284
      %380 = vadd.xlane.f32.xlu0 %v379
      %v381 = vpop.xlane.xlu0 %380
      %v382 = vadd.f32 %v285, %v286
      %383 = vadd.xlane.f32.xlu0 %v382
      %v384 = vpop.xlane.xlu0 %383
      %v385 = vadd.f32 %v287, %v288
      %386 = vadd.xlane.f32.xlu0 %v385
      %v387 = vpop.xlane.xlu0 %386
      %v388 = vadd.f32 %v289, %v290
      %389 = vadd.xlane.f32.xlu0 %v388
      %v390 = vpop.xlane.xlu0 %389
      %v391 = vadd.f32 %v291, %v292
      %392 = vadd.xlane.f32.xlu0 %v391
      %v393 = vpop.xlane.xlu0 %392
      %v394 = vadd.f32 %v293, %v294
      %395 = vadd.xlane.f32.xlu0 %v394
      %v396 = vpop.xlane.xlu0 %395
      %v397 = vadd.f32 %v295, %v296
      %398 = vadd.xlane.f32.xlu0 %v397
      %v399 = vpop.xlane.xlu0 %398
      %v400 = vadd.f32 %v297, %v298
      %401 = vadd.xlane.f32.xlu0 %v400
      %v402 = vpop.xlane.xlu0 %401
      %v403 = vadd.f32 %v299, %v300
      %404 = vadd.xlane.f32.xlu0 %v403
      %v405 = vpop.xlane.xlu0 %404
      %v406 = vadd.f32 %v301, %v302
      %407 = vadd.xlane.f32.xlu0 %v406
      %v408 = vpop.xlane.xlu0 %407
      %v409 = vadd.f32 %v303, %v304
      %410 = vadd.xlane.f32.xlu0 %v409
      %v411 = vpop.xlane.xlu0 %410
      %v412 = vadd.f32 %v305, %v306
      %413 = vadd.xlane.f32.xlu0 %v412
      %v414 = vpop.xlane.xlu0 %413
      %v415 = vadd.f32 %v307, %v308
      %416 = vadd.xlane.f32.xlu0 %v415
      %v417 = vpop.xlane.xlu0 %416
      %v418 = vadd.f32 %v309, %v310
      %419 = vadd.xlane.f32.xlu0 %v418
      %v420 = vpop.xlane.xlu0 %419
      %v421 = vadd.f32 %v311, %v312
      %422 = vadd.xlane.f32.xlu0 %v421
      %v423 = vpop.xlane.xlu0 %422
      %v424 = vadd.f32 %v313, %v314
      %425 = vadd.xlane.f32.xlu0 %v424
      %v426 = vpop.xlane.xlu0 %425
      %v427 = vadd.f32 %v315, %v316
      %428 = vadd.xlane.f32.xlu0 %v427
      %v429 = vpop.xlane.xlu0 %428
      %v430 = vadd.f32 %v317, %v318
      %431 = vadd.xlane.f32.xlu0 %v430
      %v432 = vpop.xlane.xlu0 %431
      %v433 = vadd.f32 %v319, %v320
      %434 = vadd.xlane.f32.xlu0 %v433
      %v435 = vpop.xlane.xlu0 %434
      %v436 = vadd.f32 %v321, %v322
      %437 = vadd.xlane.f32.xlu0 %v436
      %v438 = vpop.xlane.xlu0 %437
      %v439 = vadd.f32 %v323, %v324
      %440 = vadd.xlane.f32.xlu0 %v439
      %v441 = vpop.xlane.xlu0 %440
      %v442 = vadd.f32 %v325, %v326
      %443 = vadd.xlane.f32.xlu0 %v442
      %v444 = vpop.xlane.xlu0 %443
      %v445 = vadd.f32 %v327, %v328
      %446 = vadd.xlane.f32.xlu0 %v445
      %v447 = vpop.xlane.xlu0 %446
      %v448 = vadd.f32 %v329, %v330
      %449 = vadd.xlane.f32.xlu0 %v448
      %v450 = vpop.xlane.xlu0 %449
      %v451 = vadd.f32 %v331, %v332
      %452 = vadd.xlane.f32.xlu0 %v451
      %v453 = vpop.xlane.xlu0 %452
      %v454 = vadd.f32 %v333, %v334
      %455 = vadd.xlane.f32.xlu0 %v454
      %v456 = vpop.xlane.xlu0 %455
      %v457 = vadd.f32 %v335, %v336
      %458 = vadd.xlane.f32.xlu0 %v457
      %v459 = vpop.xlane.xlu0 %458
      %v460 = vadd.f32 %v337, %v338
      %461 = vadd.xlane.f32.xlu0 %v460
      %v462 = vpop.xlane.xlu0 %461
      %v463 = vadd.f32 %v339, %v340
      %464 = vadd.xlane.f32.xlu0 %v463
      %v465 = vpop.xlane.xlu0 %464
      %v466 = vadd.f32 %v341, %v342
      %467 = vadd.xlane.f32.xlu0 %v466
      %v468 = vpop.xlane.xlu0 %467
      %v469 = vadd.f32 %v343, %v344
      %470 = vadd.xlane.f32.xlu0 %v469
      %v471 = vpop.xlane.xlu0 %470
      %v472 = vadd.f32 %v345, %v346
      %473 = vadd.xlane.f32.xlu0 %v472
      %v474 = vpop.xlane.xlu0 %473
      %v475 = vadd.f32 %v347, %v348
      %476 = vadd.xlane.f32.xlu0 %v475
      %v477 = vpop.xlane.xlu0 %476
      %v478 = vadd.f32 %v349, %v350
      %479 = vadd.xlane.f32.xlu0 %v478
      %v480 = vpop.xlane.xlu0 %479
      %v481 = vadd.f32 %v351, %v352
      %482 = vadd.xlane.f32.xlu0 %v481
      %v483 = vpop.xlane.xlu0 %482
      %v484 = vadd.f32 %v353, %v354
      %485 = vadd.xlane.f32.xlu0 %v484
      %v486 = vpop.xlane.xlu0 %485
      %v487 = vadd.f32 %v355, %v356
      %488 = vadd.xlane.f32.xlu0 %v487
      %v489 = vpop.xlane.xlu0 %488
      %v490 = vadd.f32 %v357, %v358
      %491 = vadd.xlane.f32.xlu0 %v490
      %v492 = vpop.xlane.xlu0 %491
      %v493 = vadd.f32 %v359, %v360
      %494 = vadd.xlane.f32.xlu0 %v493
      %v495 = vpop.xlane.xlu0 %494
      %v496 = vadd.f32 %v361, %v362
      %497 = vadd.xlane.f32.xlu0 %v496
      %v498 = vpop.xlane.xlu0 %497
      %v499 = vadd.f32 %v363, %v364
      %500 = vadd.xlane.f32.xlu0 %v499
      %v501 = vpop.xlane.xlu0 %500
      %v502 = vadd.f32 %v365, %v366
      %503 = vadd.xlane.f32.xlu0 %v502
      %v504 = vpop.xlane.xlu0 %503
      %v505 = vadd.f32 %v367, %v368
      %506 = vadd.xlane.f32.xlu0 %v505
      %v507 = vpop.xlane.xlu0 %506
      %v508 = vadd.f32 %v369, %v370
      %509 = vadd.xlane.f32.xlu0 %v508
      %v510 = vpop.xlane.xlu0 %509
      %v511 = vadd.f32 %v371, %v372
      %512 = vadd.xlane.f32.xlu0 %v511
      %v513 = vpop.xlane.xlu0 %512
      %v514 = vadd.f32 %v373, %v374
      %515 = vadd.xlane.f32.xlu0 %v514
      %v516 = vpop.xlane.xlu0 %515
      %v517 = vadd.f32 %v375, %v376
      %518 = vadd.xlane.f32.xlu0 %v517
      %v519 = vpop.xlane.xlu0 %518
      %v520 = vadd.f32 %v377, %v378
      %521 = vadd.xlane.f32.xlu0 %v520
      %v522 = vpop.xlane.xlu0 %521
      %s523 = sld [smem:[#allocation2]]
      %v524 = vstv %s523
      %v525 = vadd.f32 %v381, %v524
      %v526 = vadd.f32 %v384, %v524
      %v527 = vadd.f32 %v387, %v524
      %v528 = vadd.f32 %v390, %v524
      %v529 = vadd.f32 %v393, %v524
      %v530 = vadd.f32 %v396, %v524
      %v531 = vadd.f32 %v399, %v524
      %v532 = vadd.f32 %v402, %v524
      %v533 = vadd.f32 %v405, %v524
      %v534 = vadd.f32 %v408, %v524
      %v535 = vadd.f32 %v411, %v524
      %v536 = vadd.f32 %v414, %v524
      %v537 = vadd.f32 %v417, %v524
      %v538 = vadd.f32 %v420, %v524
      %v539 = vadd.f32 %v423, %v524
      %v540 = vadd.f32 %v426, %v524
      %v541 = vadd.f32 %v429, %v524
      %v542 = vadd.f32 %v432, %v524
      %v543 = vadd.f32 %v435, %v524
      %v544 = vadd.f32 %v438, %v524
      %v545 = vadd.f32 %v441, %v524
      %v546 = vadd.f32 %v444, %v524
      %v547 = vadd.f32 %v447, %v524
      %v548 = vadd.f32 %v450, %v524
      %v549 = vadd.f32 %v453, %v524
      %v550 = vadd.f32 %v456, %v524
      %v551 = vadd.f32 %v459, %v524
      %v552 = vadd.f32 %v462, %v524
      %v553 = vadd.f32 %v465, %v524
      %v554 = vadd.f32 %v468, %v524
      %v555 = vadd.f32 %v471, %v524
      %v556 = vadd.f32 %v474, %v524
      %v557 = vadd.f32 %v477, %v524
      %v558 = vadd.f32 %v480, %v524
      %v559 = vadd.f32 %v483, %v524
      %v560 = vadd.f32 %v486, %v524
      %v561 = vadd.f32 %v489, %v524
      %v562 = vadd.f32 %v492, %v524
      %v563 = vadd.f32 %v495, %v524
      %v564 = vadd.f32 %v498, %v524
      %v565 = vadd.f32 %v501, %v524
      %v566 = vadd.f32 %v504, %v524
      %v567 = vadd.f32 %v507, %v524
      %v568 = vadd.f32 %v510, %v524
      %v569 = vadd.f32 %v513, %v524
      %v570 = vadd.f32 %v516, %v524
      %v571 = vadd.f32 %v519, %v524
      %v572 = vadd.f32 %v522, %v524
      %v573 = vsub.f32 0.0, %v525
      %v574 = vsub.f32 0.0, %v526
      %v575 = vsub.f32 0.0, %v527
      %v576 = vsub.f32 0.0, %v528
      %v577 = vsub.f32 0.0, %v529
      %v578 = vsub.f32 0.0, %v530
      %v579 = vsub.f32 0.0, %v531
      %v580 = vsub.f32 0.0, %v532
      %v581 = vsub.f32 0.0, %v533
      %v582 = vsub.f32 0.0, %v534
      %v583 = vsub.f32 0.0, %v535
      %v584 = vsub.f32 0.0, %v536
      %v585 = vsub.f32 0.0, %v537
      %v586 = vsub.f32 0.0, %v538
      %v587 = vsub.f32 0.0, %v539
      %v588 = vsub.f32 0.0, %v540
      %v589 = vsub.f32 0.0, %v541
      %v590 = vsub.f32 0.0, %v542
      %v591 = vsub.f32 0.0, %v543
      %v592 = vsub.f32 0.0, %v544
      %v593 = vsub.f32 0.0, %v545
      %v594 = vsub.f32 0.0, %v546
      %v595 = vsub.f32 0.0, %v547
      %v596 = vsub.f32 0.0, %v548
      %v597 = vsub.f32 0.0, %v549
      %v598 = vsub.f32 0.0, %v550
      %v599 = vsub.f32 0.0, %v551
      %v600 = vsub.f32 0.0, %v552
      %v601 = vsub.f32 0.0, %v553
      %v602 = vsub.f32 0.0, %v554
      %v603 = vsub.f32 0.0, %v555
      %v604 = vsub.f32 0.0, %v556
      %v605 = vsub.f32 0.0, %v557
      %v606 = vsub.f32 0.0, %v558
      %v607 = vsub.f32 0.0, %v559
      %v608 = vsub.f32 0.0, %v560
      %v609 = vsub.f32 0.0, %v561
      %v610 = vsub.f32 0.0, %v562
      %v611 = vsub.f32 0.0, %v563
      %v612 = vsub.f32 0.0, %v564
      %v613 = vsub.f32 0.0, %v565
      %v614 = vsub.f32 0.0, %v566
      %v615 = vsub.f32 0.0, %v567
      %v616 = vsub.f32 0.0, %v568
      %v617 = vsub.f32 0.0, %v569
      %v618 = vsub.f32 0.0, %v570
      %v619 = vsub.f32 0.0, %v571
      %v620 = vsub.f32 0.0, %v572
      %v621 = vmul.f32 %v573, 1.442695
      %v622 = vpow.pop %v621
      %v623 = vmul.f32 %v574, 1.442695
      %v624 = vpow.pop %v623
      %v625 = vmul.f32 %v575, 1.442695
      %v626 = vpow.pop %v625
      %v627 = vmul.f32 %v576, 1.442695
      %v628 = vpow.pop %v627
      %v629 = vmul.f32 %v577, 1.442695
      %v630 = vpow.pop %v629
      %v631 = vmul.f32 %v578, 1.442695
      %v632 = vpow.pop %v631
      %v633 = vmul.f32 %v579, 1.442695
      %v634 = vpow.pop %v633
      %v635 = vmul.f32 %v580, 1.442695
      %v636 = vpow.pop %v635
      %v637 = vmul.f32 %v581, 1.442695
      %v638 = vpow.pop %v637
      %v639 = vmul.f32 %v582, 1.442695
      %v640 = vpow.pop %v639
      %v641 = vmul.f32 %v583, 1.442695
      %v642 = vpow.pop %v641
      %v643 = vmul.f32 %v584, 1.442695
      %v644 = vpow.pop %v643
      %v645 = vmul.f32 %v585, 1.442695
      %v646 = vpow.pop %v645
      %v647 = vmul.f32 %v586, 1.442695
      %v648 = vpow.pop %v647
      %v649 = vmul.f32 %v587, 1.442695
      %v650 = vpow.pop %v649
      %v651 = vmul.f32 %v588, 1.442695
      %v652 = vpow.pop %v651
      %v653 = vmul.f32 %v589, 1.442695
      %v654 = vpow.pop %v653
      %v655 = vmul.f32 %v590, 1.442695
      %v656 = vpow.pop %v655
      %v657 = vmul.f32 %v591, 1.442695
      %v658 = vpow.pop %v657
      %v659 = vmul.f32 %v592, 1.442695
      %v660 = vpow.pop %v659
      %v661 = vmul.f32 %v593, 1.442695
      %v662 = vpow.pop %v661
      %v663 = vmul.f32 %v594, 1.442695
      %v664 = vpow.pop %v663
      %v665 = vmul.f32 %v595, 1.442695
      %v666 = vpow.pop %v665
      %v667 = vmul.f32 %v596, 1.442695
      %v668 = vpow.pop %v667
      %v669 = vmul.f32 %v597, 1.442695
      %v670 = vpow.pop %v669
      %v671 = vmul.f32 %v598, 1.442695
      %v672 = vpow.pop %v671
      %v673 = vmul.f32 %v599, 1.442695
      %v674 = vpow.pop %v673
      %v675 = vmul.f32 %v600, 1.442695
      %v676 = vpow.pop %v675
      %v677 = vmul.f32 %v601, 1.442695
      %v678 = vpow.pop %v677
      %v679 = vmul.f32 %v602, 1.442695
      %v680 = vpow.pop %v679
      %v681 = vmul.f32 %v603, 1.442695
      %v682 = vpow.pop %v681
      %v683 = vmul.f32 %v604, 1.442695
      %v684 = vpow.pop %v683
      %v685 = vmul.f32 %v605, 1.442695
      %v686 = vpow.pop %v685
      %v687 = vmul.f32 %v606, 1.442695
      %v688 = vpow.pop %v687
      %v689 = vmul.f32 %v607, 1.442695
      %v690 = vpow.pop %v689
      %v691 = vmul.f32 %v608, 1.442695
      %v692 = vpow.pop %v691
      %v693 = vmul.f32 %v609, 1.442695
      %v694 = vpow.pop %v693
      %v695 = vmul.f32 %v610, 1.442695
      %v696 = vpow.pop %v695
      %v697 = vmul.f32 %v611, 1.442695
      %v698 = vpow.pop %v697
      %v699 = vmul.f32 %v612, 1.442695
      %v700 = vpow.pop %v699
      %v701 = vmul.f32 %v613, 1.442695
      %v702 = vpow.pop %v701
      %v703 = vmul.f32 %v614, 1.442695
      %v704 = vpow.pop %v703
      %v705 = vmul.f32 %v615, 1.442695
      %v706 = vpow.pop %v705
      %v707 = vmul.f32 %v616, 1.442695
      %v708 = vpow.pop %v707
      %v709 = vmul.f32 %v617, 1.442695
      %v710 = vpow.pop %v709
      %v711 = vmul.f32 %v618, 1.442695
      %v712 = vpow.pop %v711
      %v713 = vmul.f32 %v619, 1.442695
      %v714 = vpow.pop %v713
      %v715 = vmul.f32 %v620, 1.442695
      %v716 = vpow.pop %v715
      %v717 = vadd.f32 %v622, 1.0
      %v718 = vadd.f32 %v624, 1.0
      %v719 = vadd.f32 %v626, 1.0
      %v720 = vadd.f32 %v628, 1.0
      %v721 = vadd.f32 %v630, 1.0
      %v722 = vadd.f32 %v632, 1.0
      %v723 = vadd.f32 %v634, 1.0
      %v724 = vadd.f32 %v636, 1.0
      %v725 = vadd.f32 %v638, 1.0
      %v726 = vadd.f32 %v640, 1.0
      %v727 = vadd.f32 %v642, 1.0
      %v728 = vadd.f32 %v644, 1.0
      %v729 = vadd.f32 %v646, 1.0
      %v730 = vadd.f32 %v648, 1.0
      %v731 = vadd.f32 %v650, 1.0
      %v732 = vadd.f32 %v652, 1.0
      %v733 = vadd.f32 %v654, 1.0
      %v734 = vadd.f32 %v656, 1.0
      %v735 = vadd.f32 %v658, 1.0
      %v736 = vadd.f32 %v660, 1.0
      %v737 = vadd.f32 %v662, 1.0
      %v738 = vadd.f32 %v664, 1.0
      %v739 = vadd.f32 %v666, 1.0
      %v740 = vadd.f32 %v668, 1.0
      %v741 = vadd.f32 %v670, 1.0
      %v742 = vadd.f32 %v672, 1.0
      %v743 = vadd.f32 %v674, 1.0
      %v744 = vadd.f32 %v676, 1.0
      %v745 = vadd.f32 %v678, 1.0
      %v746 = vadd.f32 %v680, 1.0
      %v747 = vadd.f32 %v682, 1.0
      %v748 = vadd.f32 %v684, 1.0
      %v749 = vadd.f32 %v686, 1.0
      %v750 = vadd.f32 %v688, 1.0
      %v751 = vadd.f32 %v690, 1.0
      %v752 = vadd.f32 %v692, 1.0
      %v753 = vadd.f32 %v694, 1.0
      %v754 = vadd.f32 %v696, 1.0
      %v755 = vadd.f32 %v698, 1.0
      %v756 = vadd.f32 %v700, 1.0
      %v757 = vadd.f32 %v702, 1.0
      %v758 = vadd.f32 %v704, 1.0
      %v759 = vadd.f32 %v706, 1.0
      %v760 = vadd.f32 %v708, 1.0
      %v761 = vadd.f32 %v710, 1.0
      %v762 = vadd.f32 %v712, 1.0
      %v763 = vadd.f32 %v714, 1.0
      %v764 = vadd.f32 %v716, 1.0
      %v765 = vrcp.pop %v717
      %v766 = vrcp.pop %v718
      %v767 = vrcp.pop %v719
      %v768 = vrcp.pop %v720
      %v769 = vrcp.pop %v721
      %v770 = vrcp.pop %v722
      %v771 = vrcp.pop %v723
      %v772 = vrcp.pop %v724
      %v773 = vrcp.pop %v725
      %v774 = vrcp.pop %v726
      %v775 = vrcp.pop %v727
      %v776 = vrcp.pop %v728
      %v777 = vrcp.pop %v729
      %v778 = vrcp.pop %v730
      %v779 = vrcp.pop %v731
      %v780 = vrcp.pop %v732
      %v781 = vrcp.pop %v733
      %v782 = vrcp.pop %v734
      %v783 = vrcp.pop %v735
      %v784 = vrcp.pop %v736
      %v785 = vrcp.pop %v737
      %v786 = vrcp.pop %v738
      %v787 = vrcp.pop %v739
      %v788 = vrcp.pop %v740
      %v789 = vrcp.pop %v741
      %v790 = vrcp.pop %v742
      %v791 = vrcp.pop %v743
      %v792 = vrcp.pop %v744
      %v793 = vrcp.pop %v745
      %v794 = vrcp.pop %v746
      %v795 = vrcp.pop %v747
      %v796 = vrcp.pop %v748
      %v797 = vrcp.pop %v749
      %v798 = vrcp.pop %v750
      %v799 = vrcp.pop %v751
      %v800 = vrcp.pop %v752
      %v801 = vrcp.pop %v753
      %v802 = vrcp.pop %v754
      %v803 = vrcp.pop %v755
      %v804 = vrcp.pop %v756
      %v805 = vrcp.pop %v757
      %v806 = vrcp.pop %v758
      %v807 = vrcp.pop %v759
      %v808 = vrcp.pop %v760
      %v809 = vrcp.pop %v761
      %v810 = vrcp.pop %v762
      %v811 = vrcp.pop %v763
      %v812 = vrcp.pop %v764
      %v861 = vlaneseq
      %v862 = vand.u32 %v861, 127
      %v863 = vlaneseq
      %v864 = vshrl.u32 %v863, 7
      %v865 = vsub.s32 %v862, %v864
      %v866 = vrot.slane %v765, %v865
      %v867 = vadd.s32 %v862, 4294967288
      %v868 = vlaneseq
      %v869 = vshrl.u32 %v868, 7
      %v870 = vsub.s32 %v867, %v869
      %v871 = vrot.slane %v766, %v870
      %vm872 = vcmask 130112
      %v873 = vsel %vm872, %v871, %v866
      %v874 = vadd.s32 %v862, 4294967280
      %v875 = vlaneseq
      %v876 = vshrl.u32 %v875, 7
      %v877 = vsub.s32 %v874, %v876
      %v878 = vrot.slane %v767, %v877
      %vm879 = vcmask 195712
      %v880 = vsel %vm879, %v878, %v873
      %v881 = vadd.s32 %v862, 4294967272
      %v882 = vlaneseq
      %v883 = vshrl.u32 %v882, 7
      %v884 = vsub.s32 %v881, %v883
      %v885 = vrot.slane %v768, %v884
      %vm886 = vcmask 261312
      %v887 = vsel %vm886, %v885, %v880
      %v888 = vadd.s32 %v862, 4294967264
      %v889 = vlaneseq
      %v890 = vshrl.u32 %v889, 7
      %v891 = vsub.s32 %v888, %v890
      %v892 = vrot.slane %v769, %v891
      %vm893 = vcmask 326912
      %v894 = vsel %vm893, %v892, %v887
      %v895 = vadd.s32 %v862, 4294967256
      %v896 = vlaneseq
      %v897 = vshrl.u32 %v896, 7
      %v898 = vsub.s32 %v895, %v897
      %v899 = vrot.slane %v770, %v898
      %vm900 = vcmask 392512
      %v901 = vsel %vm900, %v899, %v894
      %v902 = vadd.s32 %v862, 4294967248
      %v903 = vlaneseq
      %v904 = vshrl.u32 %v903, 7
      %v905 = vsub.s32 %v902, %v904
      %v906 = vrot.slane %v771, %v905
      %vm907 = vcmask 458112
      %v908 = vsel %vm907, %v906, %v901
      %v909 = vadd.s32 %v862, 4294967240
      %v910 = vlaneseq
      %v911 = vshrl.u32 %v910, 7
      %v912 = vsub.s32 %v909, %v911
      %v913 = vrot.slane %v772, %v912
      %vm914 = vcmask 523712
      %v915 = vsel %vm914, %v913, %v908
      %v916 = vadd.s32 %v862, 4294967232
      %v917 = vlaneseq
      %v918 = vshrl.u32 %v917, 7
      %v919 = vsub.s32 %v916, %v918
      %v920 = vrot.slane %v773, %v919
      %vm921 = vcmask 589312
      %v922 = vsel %vm921, %v920, %v915
      %v923 = vadd.s32 %v862, 4294967224
      %v924 = vlaneseq
      %v925 = vshrl.u32 %v924, 7
      %v926 = vsub.s32 %v923, %v925
      %v927 = vrot.slane %v774, %v926
      %vm928 = vcmask 654912
      %v929 = vsel %vm928, %v927, %v922
      %v930 = vadd.s32 %v862, 4294967216
      %v931 = vlaneseq
      %v932 = vshrl.u32 %v931, 7
      %v933 = vsub.s32 %v930, %v932
      %v934 = vrot.slane %v775, %v933
      %vm935 = vcmask 720512
      %v936 = vsel %vm935, %v934, %v929
      %v937 = vadd.s32 %v862, 4294967208
      %v938 = vlaneseq
      %v939 = vshrl.u32 %v938, 7
      %v940 = vsub.s32 %v937, %v939
      %v941 = vrot.slane %v776, %v940
      %vm942 = vcmask 786112
      %v943 = vsel %vm942, %v941, %v936
      %v944 = vadd.s32 %v862, 4294967200
      %v945 = vlaneseq
      %v946 = vshrl.u32 %v945, 7
      %v947 = vsub.s32 %v944, %v946
      %v948 = vrot.slane %v777, %v947
      %vm949 = vcmask 851712
      %v950 = vsel %vm949, %v948, %v943
      %v951 = vadd.s32 %v862, 4294967192
      %v952 = vlaneseq
      %v953 = vshrl.u32 %v952, 7
      %v954 = vsub.s32 %v951, %v953
      %v955 = vrot.slane %v778, %v954
      %vm956 = vcmask 917312
      %v957 = vsel %vm956, %v955, %v950
      %v958 = vadd.s32 %v862, 4294967184
      %v959 = vlaneseq
      %v960 = vshrl.u32 %v959, 7
      %v961 = vsub.s32 %v958, %v960
      %v962 = vrot.slane %v779, %v961
      %vm963 = vcmask 982912
      %v964 = vsel %vm963, %v962, %v957
      %v965 = vadd.s32 %v862, 4294967176
      %v966 = vlaneseq
      %v967 = vshrl.u32 %v966, 7
      %v968 = vsub.s32 %v965, %v967
      %v969 = vrot.slane %v780, %v968
      %vm970 = vcmask 1048512
      %v971 = vsel %vm970, %v969, %v964
      %v972 = vlaneseq
      %v973 = vshrl.u32 %v972, 7
      %v974 = vsub.s32 %v862, %v973
      %v975 = vrot.slane %v781, %v974
      %v976 = vlaneseq
      %v977 = vshrl.u32 %v976, 7
      %v978 = vsub.s32 %v867, %v977
      %v979 = vrot.slane %v782, %v978
      %v980 = vsel %vm872, %v979, %v975
      %v981 = vlaneseq
      %v982 = vshrl.u32 %v981, 7
      %v983 = vsub.s32 %v874, %v982
      %v984 = vrot.slane %v783, %v983
      %v985 = vsel %vm879, %v984, %v980
      %v986 = vlaneseq
      %v987 = vshrl.u32 %v986, 7
      %v988 = vsub.s32 %v881, %v987
      %v989 = vrot.slane %v784, %v988
      %v990 = vsel %vm886, %v989, %v985
      %v991 = vlaneseq
      %v992 = vshrl.u32 %v991, 7
      %v993 = vsub.s32 %v888, %v992
      %v994 = vrot.slane %v785, %v993
      %v995 = vsel %vm893, %v994, %v990
      %v996 = vlaneseq
      %v997 = vshrl.u32 %v996, 7
      %v998 = vsub.s32 %v895, %v997
      %v999 = vrot.slane %v786, %v998
      %v1000 = vsel %vm900, %v999, %v995
      %v1001 = vlaneseq
      %v1002 = vshrl.u32 %v1001, 7
      %v1003 = vsub.s32 %v902, %v1002
      %v1004 = vrot.slane %v787, %v1003
      %v1005 = vsel %vm907, %v1004, %v1000
      %v1006 = vlaneseq
      %v1007 = vshrl.u32 %v1006, 7
      %v1008 = vsub.s32 %v909, %v1007
      %v1009 = vrot.slane %v788, %v1008
      %v1010 = vsel %vm914, %v1009, %v1005
      %v1011 = vlaneseq
      %v1012 = vshrl.u32 %v1011, 7
      %v1013 = vsub.s32 %v916, %v1012
      %v1014 = vrot.slane %v789, %v1013
      %v1015 = vsel %vm921, %v1014, %v1010
      %v1016 = vlaneseq
      %v1017 = vshrl.u32 %v1016, 7
      %v1018 = vsub.s32 %v923, %v1017
      %v1019 = vrot.slane %v790, %v1018
      %v1020 = vsel %vm928, %v1019, %v1015
      %v1021 = vlaneseq
      %v1022 = vshrl.u32 %v1021, 7
      %v1023 = vsub.s32 %v930, %v1022
      %v1024 = vrot.slane %v791, %v1023
      %v1025 = vsel %vm935, %v1024, %v1020
      %v1026 = vlaneseq
      %v1027 = vshrl.u32 %v1026, 7
      %v1028 = vsub.s32 %v937, %v1027
      %v1029 = vrot.slane %v792, %v1028
      %v1030 = vsel %vm942, %v1029, %v1025
      %v1031 = vlaneseq
      %v1032 = vshrl.u32 %v1031, 7
      %v1033 = vsub.s32 %v944, %v1032
      %v1034 = vrot.slane %v793, %v1033
      %v1035 = vsel %vm949, %v1034, %v1030
      %v1036 = vlaneseq
      %v1037 = vshrl.u32 %v1036, 7
      %v1038 = vsub.s32 %v951, %v1037
      %v1039 = vrot.slane %v794, %v1038
      %v1040 = vsel %vm956, %v1039, %v1035
      %v1041 = vlaneseq
      %v1042 = vshrl.u32 %v1041, 7
      %v1043 = vsub.s32 %v958, %v1042
      %v1044 = vrot.slane %v795, %v1043
      %v1045 = vsel %vm963, %v1044, %v1040
      %v1046 = vlaneseq
      %v1047 = vshrl.u32 %v1046, 7
      %v1048 = vsub.s32 %v965, %v1047
      %v1049 = vrot.slane %v796, %v1048
      %v1050 = vsel %vm970, %v1049, %v1045
      %v1051 = vlaneseq
      %v1052 = vshrl.u32 %v1051, 7
      %v1053 = vsub.s32 %v862, %v1052
      %v1054 = vrot.slane %v797, %v1053
      %v1055 = vlaneseq
      %v1056 = vshrl.u32 %v1055, 7
      %v1057 = vsub.s32 %v867, %v1056
      %v1058 = vrot.slane %v798, %v1057
      %v1059 = vsel %vm872, %v1058, %v1054
      %v1060 = vlaneseq
      %v1061 = vshrl.u32 %v1060, 7
      %v1062 = vsub.s32 %v874, %v1061
      %v1063 = vrot.slane %v799, %v1062
      %v1064 = vsel %vm879, %v1063, %v1059
      %v1065 = vlaneseq
      %v1066 = vshrl.u32 %v1065, 7
      %v1067 = vsub.s32 %v881, %v1066
      %v1068 = vrot.slane %v800, %v1067
      %v1069 = vsel %vm886, %v1068, %v1064
      %v1070 = vlaneseq
      %v1071 = vshrl.u32 %v1070, 7
      %v1072 = vsub.s32 %v888, %v1071
      %v1073 = vrot.slane %v801, %v1072
      %v1074 = vsel %vm893, %v1073, %v1069
      %v1075 = vlaneseq
      %v1076 = vshrl.u32 %v1075, 7
      %v1077 = vsub.s32 %v895, %v1076
      %v1078 = vrot.slane %v802, %v1077
      %v1079 = vsel %vm900, %v1078, %v1074
      %v1080 = vlaneseq
      %v1081 = vshrl.u32 %v1080, 7
      %v1082 = vsub.s32 %v902, %v1081
      %v1083 = vrot.slane %v803, %v1082
      %v1084 = vsel %vm907, %v1083, %v1079
      %v1085 = vlaneseq
      %v1086 = vshrl.u32 %v1085, 7
      %v1087 = vsub.s32 %v909, %v1086
      %v1088 = vrot.slane %v804, %v1087
      %v1089 = vsel %vm914, %v1088, %v1084
      %v1090 = vlaneseq
      %v1091 = vshrl.u32 %v1090, 7
      %v1092 = vsub.s32 %v916, %v1091
      %v1093 = vrot.slane %v805, %v1092
      %v1094 = vsel %vm921, %v1093, %v1089
      %v1095 = vlaneseq
      %v1096 = vshrl.u32 %v1095, 7
      %v1097 = vsub.s32 %v923, %v1096
      %v1098 = vrot.slane %v806, %v1097
      %v1099 = vsel %vm928, %v1098, %v1094
      %v1100 = vlaneseq
      %v1101 = vshrl.u32 %v1100, 7
      %v1102 = vsub.s32 %v930, %v1101
      %v1103 = vrot.slane %v807, %v1102
      %v1104 = vsel %vm935, %v1103, %v1099
      %v1105 = vlaneseq
      %v1106 = vshrl.u32 %v1105, 7
      %v1107 = vsub.s32 %v937, %v1106
      %v1108 = vrot.slane %v808, %v1107
      %v1109 = vsel %vm942, %v1108, %v1104
      %v1110 = vlaneseq
      %v1111 = vshrl.u32 %v1110, 7
      %v1112 = vsub.s32 %v944, %v1111
      %v1113 = vrot.slane %v809, %v1112
      %v1114 = vsel %vm949, %v1113, %v1109
      %v1115 = vlaneseq
      %v1116 = vshrl.u32 %v1115, 7
      %v1117 = vsub.s32 %v951, %v1116
      %v1118 = vrot.slane %v810, %v1117
      %v1119 = vsel %vm956, %v1118, %v1114
      %v1120 = vlaneseq
      %v1121 = vshrl.u32 %v1120, 7
      %v1122 = vsub.s32 %v958, %v1121
      %v1123 = vrot.slane %v811, %v1122
      %v1124 = vsel %vm963, %v1123, %v1119
      %v1125 = vlaneseq
      %v1126 = vshrl.u32 %v1125, 7
      %v1127 = vsub.s32 %v965, %v1126
      %v1128 = vrot.slane %v812, %v1127
      %v1129 = vsel %vm970, %v1128, %v1124
      %vm1130 = vcmask 1041409
      %v1131 = vsel %vm1130, %v1050, %v971
      %vm1132 = vcmask 1042434
      %v1133 = vsel %vm1132, %v1129, %v1131
      %1135 = vst [vmem:[%s174] sm:$0x7] %v1133
      %p1136 = scmp.lt.s32.totalorder %s15, 1
      %s1137 = scalar_select %p1136, %s15, 1
      %s1138 = smul.addr %s1137, 4
      %s1139 = scalar_lea.vmem %s3, %s1138
      // Predicated region
      $region33: #{token_confidence.3} parent=31 // pred_check
        %p1140 = pneg %p101
      $region34: #{token_confidence.3} parent=31 // pred_check_branch
        %1142 = sbr.rel (%p1140) target = $region36
      $region35: #{token_confidence.3} parent=31 // pred_region
        _
      $region36: #{token_confidence.3} parent=31 // pred_fallthru
        _
    $region32: #{token_confidence.3} parent=5 // pred_fallthru
      _
    %p1143 = scmp.le.s32.totalorder 2, %s10
    // Predicated region
    $region37: #{token_confidence.3} parent=5 // pred_check
      %p1144 = pneg %p1143
    $region38: #{token_confidence.3} parent=5 // pred_check_branch
      %1146 = sbr.rel (%p1144) target = $region40
    $region39: #{token_confidence.3} parent=5 // pred_region
      %s1147 = ssub.s32 %s10, 2
      // Predicated region
      $region41: #{token_confidence.3} parent=39 // pred_check
        %p1148 = pneg %p107
      $region42: #{token_confidence.3} parent=39 // pred_check_branch
        %1150 = sbr.rel (%p1148) target = $region44
      $region43: #{token_confidence.3} parent=39 // pred_region
        %p1151 = scmp.lt.s32.totalorder %s16, 1
        %s1152 = scalar_select %p1151, %s16, 1
        %s1153 = smul.addr %s1152, 4
        %s1154 = scalar_lea.vmem %s3, %s1153
      $region44: #{token_confidence.3} parent=39 // pred_fallthru
        _
    $region40: #{token_confidence.3} parent=5 // pred_fallthru
      _
  $region6: #{token_confidence.3} parent=0 // loop_footer
    %s14 = sadd.s32 1, %s10
  $region7: #{token_confidence.3} parent=0 // loop_footer_branch
    %9 = sbr.rel target = $region3
  $region8: #{token_confidence.3} parent=0 // loop_exit
    _

</llo_original>
